<compile_context>
chip_gen: v5e
topology: v5e:2x2
jax: 0.10.0
libtpu: 0.0.40
codegen_flags: <defaults>
</compile_context>

<pallas_src>
import jax
import jax.numpy as jnp
from jax.experimental import pallas as pl
from jax.experimental.pallas import tpu as pltpu

# ----------------------------- model hyper-params (small test sizes) ---------
VOCAB_SIZE = 64
EMB_DIM = 32
HID_DIM = 32
NUM_LAYERS = 2
BATCH = 2
SEQ = 8
DROPOUT_RATE = 0.65  # unused at inference
LANE = 128           # pad FC output to a lane-dense width


# ----------------------------- fused model kernel ----------------------------
def _lstm_lm_kernel(ids_ref,                      # (T*B, 1) int32 token ids (time-major)
                    h0_ref, c0_ref,               # (L, B, H) initial state
                    ftab_ref,                     # (V, 4H) embedding @ W_ih0^T + b0
                    w0h_ref,                      # (H, 4H)  W_hh0^T
                    w1_ref, b1_ref,               # (2H, 4H) [W_ih1^T; W_hh1^T], (1, 4H)
                    fcw_ref, fcb_ref,             # (H, Vp) fc W^T padded, (1, Vp)
                    pred_ref, hn_ref, cn_ref,     # (T*B, Vp), (L, B, H), (L, B, H)
                    h_all):                       # VMEM scratch (T*B, H)
    TB, _ = pred_ref.shape
    _, B, H = hn_ref.shape
    T = TB // B
    V = ftab_ref.shape[0]

    # ---- one-hot MXU gather of the fused (embedding -> layer-0 gates) table --
    ids = ids_ref[...]                                               # (T*B, 1)
    onehot = (jax.lax.broadcasted_iota(jnp.int32, (TB, V), 1)
              == ids).astype(jnp.float32)                            # (T*B, V)
    gx0 = jnp.dot(onehot, ftab_ref[...],
                  preferred_element_type=jnp.float32)                # (T*B, 4H)

    w0h = w0h_ref[...]
    w1 = w1_ref[...]
    b1 = b1_ref[...]

    # recurrent state lives in vregs for the whole (unrolled) sequence
    h_l0 = h0_ref[0]
    c_l0 = c0_ref[0]
    h_l1 = h0_ref[1]
    c_l1 = c0_ref[1]

    def cell_tail(gates, c_prev):
        # vreg-wide activations on the full (B, 4H) tile, then slice.
        # PyTorch gate order [i, f, g, o].
        sig = jax.nn.sigmoid(gates)
        th = jnp.tanh(gates)
        i = sig[:, 0 * H:1 * H]
        f = sig[:, 1 * H:2 * H]
        g = th[:, 2 * H:3 * H]
        o = sig[:, 3 * H:4 * H]
        c_new = f * c_prev + i * g
        h_new = o * jnp.tanh(c_new)
        return h_new, c_new

    # ---- fully unrolled sequential recurrence (static T) ---------------------
    for t in range(T):
        # layer 0: input projection pre-gathered; only h @ W_hh on the chain
        g0 = gx0[t * B:(t + 1) * B, :] + jnp.dot(
            h_l0, w0h, preferred_element_type=jnp.float32)
        h_l0, c_l0 = cell_tail(g0, c_l0)

        # layer 1 (inter-layer dropout == identity at eval): single merged dot
        x1 = jnp.concatenate([h_l0, h_l1], axis=1)                   # (B, 2H)
        g1 = jnp.dot(x1, w1, preferred_element_type=jnp.float32) + b1
        h_l1, c_l1 = cell_tail(g1, c_l1)

        # stash layer-1 output; FC head is deferred past the loop
        h_all[pl.ds(t * B, B), :] = h_l1

    # ---- deferred FC head: one matmul, one lane-dense slab store -------------
    pred_ref[...] = (jnp.dot(h_all[...], fcw_ref[...],
                             preferred_element_type=jnp.float32)
                     + fcb_ref[...])

    hn_ref[0] = h_l0
    hn_ref[1] = h_l1
    cn_ref[0] = c_l0
    cn_ref[1] = c_l1


# ----------------------------- wrapper ---------------------------------------
@jax.jit
def lstm_language_model_forward(src, hidden, cell, params):
    """src: (B, T) int32 token ids; hidden/cell: (L, B, H) float32.
    Returns prediction (B, T, V) and (hidden, cell), each (L, B, H)."""
    B, T = src.shape
    L, _, H = hidden.shape
    V = params["fused_table"].shape[0]
    Vp = params["fc_b"].shape[1]

    # time-major ids: row t*B + b  (makes per-step slices contiguous in-kernel)
    ids_tm = src.T.reshape(T * B, 1).astype(jnp.int32)

    pred_tm, h_n, c_n = pl.pallas_call(
        _lstm_lm_kernel,
        grid=(1,),                       # whole model in one invocation
        in_specs=[
            pl.BlockSpec((T * B, 1), lambda i: (0, 0)),         # ids (VMEM)
            pl.BlockSpec((L, B, H), lambda i: (0, 0, 0)),        # h0
            pl.BlockSpec((L, B, H), lambda i: (0, 0, 0)),        # c0
            pl.BlockSpec((V, 4 * H), lambda i: (0, 0)),          # fused emb->gate table
            pl.BlockSpec((H, 4 * H), lambda i: (0, 0)),          # W_hh0^T
            pl.BlockSpec((2 * H, 4 * H), lambda i: (0, 0)),      # [W_ih1^T; W_hh1^T]
            pl.BlockSpec((1, 4 * H), lambda i: (0, 0)),          # bias1
            pl.BlockSpec((H, Vp), lambda i: (0, 0)),             # fc W^T (lane-padded)
            pl.BlockSpec((1, Vp), lambda i: (0, 0)),             # fc b   (lane-padded)
        ],
        out_specs=(
            pl.BlockSpec((T * B, Vp), lambda i: (0, 0)),         # prediction (time-major)
            pl.BlockSpec((L, B, H), lambda i: (0, 0, 0)),        # h_n
            pl.BlockSpec((L, B, H), lambda i: (0, 0, 0)),        # c_n
        ),
        out_shape=(
            jax.ShapeDtypeStruct((T * B, Vp), jnp.float32),
            jax.ShapeDtypeStruct((L, B, H), jnp.float32),
            jax.ShapeDtypeStruct((L, B, H), jnp.float32),
        ),
        scratch_shapes=[pltpu.VMEM((T * B, H), jnp.float32)],     # per-step h_l1
        compiler_params=pltpu.CompilerParams(
            dimension_semantics=("arbitrary",)),
    )(ids_tm, hidden, cell, params["fused_table"],
      params["w0h_t"], params["w1_stacked"], params["b1"],
      params["fc_w_t"], params["fc_b"])

    # layout plumbing back to (B, T, V) outside the kernel
    pred = pred_tm[:, :V].reshape(T, B, V).transpose(1, 0, 2)
    return pred, (h_n, c_n)


# ----------------------------- parameter init (PyTorch layout) ----------------
def init_torch_params(key):
    ks = jax.random.split(key, 11)
    bound = 1.0 / jnp.sqrt(HID_DIM)
    u = lambda k, shape: jax.random.uniform(k, shape, jnp.float32, -bound, bound)
    return {
        "embedding": jax.random.normal(ks[0], (VOCAB_SIZE, EMB_DIM), jnp.float32),
        "wih0": u(ks[1], (4 * HID_DIM, EMB_DIM)),
        "whh0": u(ks[2], (4 * HID_DIM, HID_DIM)),
        "bih0": u(ks[3], (4 * HID_DIM,)),
        "bhh0": u(ks[4], (4 * HID_DIM,)),
        "wih1": u(ks[5], (4 * HID_DIM, HID_DIM)),
        "whh1": u(ks[6], (4 * HID_DIM, HID_DIM)),
        "bih1": u(ks[7], (4 * HID_DIM,)),
        "bhh1": u(ks[8], (4 * HID_DIM,)),
        "fc_w": u(ks[9], (VOCAB_SIZE, HID_DIM)),
        "fc_b": u(ks[10], (VOCAB_SIZE,)),
    }


def prepare_kernel_params(p):
    """Fuse embedding into the layer-0 projection, fold biases, stack the
    layer-1 weights, transpose, and lane-pad the fc head."""
    b0 = p["bih0"] + p["bhh0"]
    fused_table = p["embedding"] @ p["wih0"].T + b0            # (V, 4H)

    vocab, hid = p["fc_w"].shape
    v_pad = ((vocab + LANE - 1) // LANE) * LANE
    fc_w_t = jnp.zeros((hid, v_pad), jnp.float32).at[:, :vocab].set(p["fc_w"].T)
    fc_b = jnp.zeros((1, v_pad), jnp.float32).at[:, :vocab].set(p["fc_b"])

    return {
        "fused_table": fused_table,
        "w0h_t": p["whh0"].T,
        "w1_stacked": jnp.concatenate([p["wih1"].T, p["whh1"].T], axis=0),  # (2H, 4H)
        "b1": (p["bih1"] + p["bhh1"]).reshape(1, -1),
        "fc_w_t": fc_w_t,
        "fc_b": fc_b,
    }


# ----------------------------- pure-JAX reference -----------------------------
def reference_forward(src, hidden, cell, p):
    emb = jnp.take(p["embedding"], src, axis=0)          # (B, T, E)
    B, T, _ = emb.shape
    H = HID_DIM
    layers = [(p["wih0"], p["whh0"], p["bih0"], p["bhh0"]),
              (p["wih1"], p["whh1"], p["bih1"], p["bhh1"])]
    h = [hidden[l] for l in range(NUM_LAYERS)]
    c = [cell[l] for l in range(NUM_LAYERS)]
    outs = []
    for t in range(T):
        inp = emb[:, t, :]
        for l, (wih, whh, bih, bhh) in enumerate(layers):
            gates = inp @ wih.T + h[l] @ whh.T + bih + bhh
            i = jax.nn.sigmoid(gates[:, 0 * H:1 * H])
            f = jax.nn.sigmoid(gates[:, 1 * H:2 * H])
            g = jnp.tanh(gates[:, 2 * H:3 * H])
            o = jax.nn.sigmoid(gates[:, 3 * H:4 * H])
            c[l] = f * c[l] + i * g
            h[l] = o * jnp.tanh(c[l])
            inp = h[l]
        outs.append(inp)
    out = jnp.stack(outs, axis=1)                        # (B, T, H)
    pred = out @ p["fc_w"].T + p["fc_b"]
    return pred, (jnp.stack(h), jnp.stack(c))


if __name__ == "__main__":
    key = jax.random.PRNGKey(0)
    k_par, k_src = jax.random.split(key)
    torch_params = init_torch_params(k_par)
    params = prepare_kernel_params(torch_params)

    src = jax.random.randint(k_src, (BATCH, SEQ), 0, VOCAB_SIZE, dtype=jnp.int32)
    hidden = jnp.zeros((NUM_LAYERS, BATCH, HID_DIM), jnp.float32)
    cell = jnp.zeros((NUM_LAYERS, BATCH, HID_DIM), jnp.float32)

    pred, (h_n, c_n) = lstm_language_model_forward(src, hidden, cell, params)
    pred = jax.block_until_ready(pred)
    h_n = jax.block_until_ready(h_n)
    c_n = jax.block_until_ready(c_n)

    ref_pred, (ref_h, ref_c) = reference_forward(src, hidden, cell, torch_params)
    assert pred.shape == (BATCH, SEQ, VOCAB_SIZE)
    assert h_n.shape == (NUM_LAYERS, BATCH, HID_DIM)
    assert c_n.shape == (NUM_LAYERS, BATCH, HID_DIM)
    assert jnp.allclose(pred, ref_pred, atol=1e-4, rtol=1e-4)
    assert jnp.allclose(h_n, ref_h, atol=1e-4, rtol=1e-4)
    assert jnp.allclose(c_n, ref_c, atol=1e-4, rtol=1e-4)

    print("KERNEL_OK")
</pallas_src>

<mosaic_0001>
module attributes {stable_mosaic.version = 11 : i64} {
  func.func @_lstm_lm_kernel(%arg0: i32, %arg1: memref<16x1xi32, #tpu.memory_space<vmem>>, %arg2: memref<2x2x32xf32, #tpu.memory_space<vmem>>, %arg3: memref<2x2x32xf32, #tpu.memory_space<vmem>>, %arg4: memref<64x128xf32, #tpu.memory_space<vmem>>, %arg5: memref<32x128xf32, #tpu.memory_space<vmem>>, %arg6: memref<64x128xf32, #tpu.memory_space<vmem>>, %arg7: memref<1x128xf32, #tpu.memory_space<vmem>>, %arg8: memref<32x128xf32, #tpu.memory_space<vmem>>, %arg9: memref<1x128xf32, #tpu.memory_space<vmem>>, %arg10: memref<16x128xf32, #tpu.memory_space<vmem>>, %arg11: memref<2x2x32xf32, #tpu.memory_space<vmem>>, %arg12: memref<2x2x32xf32, #tpu.memory_space<vmem>>, %arg13: memref<16x32xf32, #tpu.memory_space<vmem>>) attributes {dimension_semantics = [#tpu.dimension_semantics<arbitrary>], iteration_bounds = array<i64: 1>, scalar_prefetch = 0 : i64, scratch_operands = 1 : i64, tpu.core_type = #tpu.core_type<tc>, window_params = [{pipeline_mode = #tpu.pipeline_mode<synchronous>, transform_indices = @transform_0, window_bounds = array<i64: 16, 1>}, {pipeline_mode = #tpu.pipeline_mode<synchronous>, transform_indices = @transform_1, window_bounds = array<i64: 2, 2, 32>}, {pipeline_mode = #tpu.pipeline_mode<synchronous>, transform_indices = @transform_2, window_bounds = array<i64: 2, 2, 32>}, {pipeline_mode = #tpu.pipeline_mode<synchronous>, transform_indices = @transform_3, window_bounds = array<i64: 64, 128>}, {pipeline_mode = #tpu.pipeline_mode<synchronous>, transform_indices = @transform_4, window_bounds = array<i64: 32, 128>}, {pipeline_mode = #tpu.pipeline_mode<synchronous>, transform_indices = @transform_5, window_bounds = array<i64: 64, 128>}, {pipeline_mode = #tpu.pipeline_mode<synchronous>, transform_indices = @transform_6, window_bounds = array<i64: 1, 128>}, {pipeline_mode = #tpu.pipeline_mode<synchronous>, transform_indices = @transform_7, window_bounds = array<i64: 32, 128>}, {pipeline_mode = #tpu.pipeline_mode<synchronous>, transform_indices = @transform_8, window_bounds = array<i64: 1, 128>}, {pipeline_mode = #tpu.pipeline_mode<synchronous>, transform_indices = @transform_9, window_bounds = array<i64: 16, 128>}, {pipeline_mode = #tpu.pipeline_mode<synchronous>, transform_indices = @transform_10, window_bounds = array<i64: 2, 2, 32>}, {pipeline_mode = #tpu.pipeline_mode<synchronous>, transform_indices = @transform_11, window_bounds = array<i64: 2, 2, 32>}]} {
    %c0 = arith.constant 0 : index
    %c0_0 = arith.constant 0 : index
    %0 = vector.load %arg1[%c0, %c0_0] : memref<16x1xi32, #tpu.memory_space<vmem>>, vector<16x1xi32>
    %1 = tpu.iota {dimensions = array<i32: 1>} : vector<16x64xi32>
    %2 = vector.broadcast %0 : vector<16x1xi32> to vector<16x64xi32>
    %3 = arith.cmpi eq, %1, %2 : vector<16x64xi32>
    %4 = arith.extui %3 : vector<16x64xi1> to vector<16x64xi32>
    %5 = arith.sitofp %4 : vector<16x64xi32> to vector<16x64xf32>
    %c0_1 = arith.constant 0 : index
    %c0_2 = arith.constant 0 : index
    %6 = vector.load %arg4[%c0_1, %c0_2] : memref<64x128xf32, #tpu.memory_space<vmem>>, vector<64x128xf32>
    %cst = arith.constant dense<0.000000e+00> : vector<16x128xf32>
    %7 = tpu.matmul %5, %6, %cst {dimension_numbers = #tpu.dot_dimension_numbers<[1], [0], [0], [1], [0, 0, 1, 1], [], []>} : vector<16x64xf32>, vector<64x128xf32>, vector<16x128xf32> -> vector<16x128xf32>
    %c0_3 = arith.constant 0 : index
    %c0_4 = arith.constant 0 : index
    %8 = vector.load %arg5[%c0_3, %c0_4] : memref<32x128xf32, #tpu.memory_space<vmem>>, vector<32x128xf32>
    %c0_5 = arith.constant 0 : index
    %c0_6 = arith.constant 0 : index
    %9 = vector.load %arg6[%c0_5, %c0_6] : memref<64x128xf32, #tpu.memory_space<vmem>>, vector<64x128xf32>
    %c0_7 = arith.constant 0 : index
    %c0_8 = arith.constant 0 : index
    %10 = vector.load %arg7[%c0_7, %c0_8] : memref<1x128xf32, #tpu.memory_space<vmem>>, vector<1x128xf32>
    %c0_9 = arith.constant 0 : index
    %c0_10 = arith.constant 0 : index
    %c0_11 = arith.constant 0 : index
    %11 = vector.load %arg2[%c0_9, %c0_10, %c0_11] : memref<2x2x32xf32, #tpu.memory_space<vmem>>, vector<1x2x32xf32>
    %12 = vector.shape_cast %11 : vector<1x2x32xf32> to vector<2x32xf32>
    %c0_12 = arith.constant 0 : index
    %c0_13 = arith.constant 0 : index
    %c0_14 = arith.constant 0 : index
    %13 = vector.load %arg3[%c0_12, %c0_13, %c0_14] : memref<2x2x32xf32, #tpu.memory_space<vmem>>, vector<1x2x32xf32>
    %14 = vector.shape_cast %13 : vector<1x2x32xf32> to vector<2x32xf32>
    %c1 = arith.constant 1 : index
    %c0_15 = arith.constant 0 : index
    %c0_16 = arith.constant 0 : index
    %15 = vector.load %arg2[%c1, %c0_15, %c0_16] : memref<2x2x32xf32, #tpu.memory_space<vmem>>, vector<1x2x32xf32>
    %16 = vector.shape_cast %15 : vector<1x2x32xf32> to vector<2x32xf32>
    %c1_17 = arith.constant 1 : index
    %c0_18 = arith.constant 0 : index
    %c0_19 = arith.constant 0 : index
    %17 = vector.load %arg3[%c1_17, %c0_18, %c0_19] : memref<2x2x32xf32, #tpu.memory_space<vmem>>, vector<1x2x32xf32>
    %18 = vector.shape_cast %17 : vector<1x2x32xf32> to vector<2x32xf32>
    %19 = vector.extract_strided_slice %7 {offsets = [0, 0], sizes = [2, 128], strides = [1, 1]} : vector<16x128xf32> to vector<2x128xf32>
    %cst_20 = arith.constant dense<0.000000e+00> : vector<2x128xf32>
    %20 = tpu.matmul %12, %8, %cst_20 {dimension_numbers = #tpu.dot_dimension_numbers<[1], [0], [0], [1], [0, 0, 1, 1], [], []>} : vector<2x32xf32>, vector<32x128xf32>, vector<2x128xf32> -> vector<2x128xf32>
    %21 = arith.addf %19, %20 : vector<2x128xf32>
    %22 = arith.negf %21 : vector<2x128xf32>
    %23 = math.exp %22 : vector<2x128xf32>
    %cst_21 = arith.constant 1.000000e+00 : f32
    %24 = vector.broadcast %cst_21 : f32 to vector<2x128xf32>
    %25 = arith.addf %24, %23 : vector<2x128xf32>
    %26 = arith.divf %24, %25 : vector<2x128xf32>
    %27 = math.tanh %21 : vector<2x128xf32>
    %28 = vector.extract_strided_slice %26 {offsets = [0, 0], sizes = [2, 32], strides = [1, 1]} : vector<2x128xf32> to vector<2x32xf32>
    %29 = vector.extract_strided_slice %26 {offsets = [0, 32], sizes = [2, 32], strides = [1, 1]} : vector<2x128xf32> to vector<2x32xf32>
    %30 = vector.extract_strided_slice %27 {offsets = [0, 64], sizes = [2, 32], strides = [1, 1]} : vector<2x128xf32> to vector<2x32xf32>
    %31 = vector.extract_strided_slice %26 {offsets = [0, 96], sizes = [2, 32], strides = [1, 1]} : vector<2x128xf32> to vector<2x32xf32>
    %32 = arith.mulf %29, %14 : vector<2x32xf32>
    %33 = arith.mulf %28, %30 : vector<2x32xf32>
    %34 = arith.addf %32, %33 : vector<2x32xf32>
    %35 = math.tanh %34 : vector<2x32xf32>
    %36 = arith.mulf %31, %35 : vector<2x32xf32>
    %37 = tpu.concatenate %36, %16 in 1 : vector<2x32xf32>, vector<2x32xf32> -> vector<2x64xf32>
    %cst_22 = arith.constant dense<0.000000e+00> : vector<2x128xf32>
    %38 = tpu.matmul %37, %9, %cst_22 {dimension_numbers = #tpu.dot_dimension_numbers<[1], [0], [0], [1], [0, 0, 1, 1], [], []>} : vector<2x64xf32>, vector<64x128xf32>, vector<2x128xf32> -> vector<2x128xf32>
    %39 = vector.broadcast %10 : vector<1x128xf32> to vector<2x128xf32>
    %40 = arith.addf %38, %39 : vector<2x128xf32>
    %41 = arith.negf %40 : vector<2x128xf32>
    %42 = math.exp %41 : vector<2x128xf32>
    %cst_23 = arith.constant 1.000000e+00 : f32
    %43 = vector.broadcast %cst_23 : f32 to vector<2x128xf32>
    %44 = arith.addf %43, %42 : vector<2x128xf32>
    %45 = arith.divf %43, %44 : vector<2x128xf32>
    %46 = math.tanh %40 : vector<2x128xf32>
    %47 = vector.extract_strided_slice %45 {offsets = [0, 0], sizes = [2, 32], strides = [1, 1]} : vector<2x128xf32> to vector<2x32xf32>
    %48 = vector.extract_strided_slice %45 {offsets = [0, 32], sizes = [2, 32], strides = [1, 1]} : vector<2x128xf32> to vector<2x32xf32>
    %49 = vector.extract_strided_slice %46 {offsets = [0, 64], sizes = [2, 32], strides = [1, 1]} : vector<2x128xf32> to vector<2x32xf32>
    %50 = vector.extract_strided_slice %45 {offsets = [0, 96], sizes = [2, 32], strides = [1, 1]} : vector<2x128xf32> to vector<2x32xf32>
    %51 = arith.mulf %48, %18 : vector<2x32xf32>
    %52 = arith.mulf %47, %49 : vector<2x32xf32>
    %53 = arith.addf %51, %52 : vector<2x32xf32>
    %54 = math.tanh %53 : vector<2x32xf32>
    %55 = arith.mulf %50, %54 : vector<2x32xf32>
    %c0_24 = arith.constant 0 : index
    %c0_25 = arith.constant 0 : index
    %56 = vector.load %arg13[%c0_24, %c0_25] : memref<16x32xf32, #tpu.memory_space<vmem>>, vector<2x32xf32>
    tpu.vector_store %arg13[%c0_24, %c0_25], %55 {strides = array<i32>} : memref<16x32xf32, #tpu.memory_space<vmem>>, vector<2x32xf32>,
    %57 = vector.extract_strided_slice %7 {offsets = [2, 0], sizes = [2, 128], strides = [1, 1]} : vector<16x128xf32> to vector<2x128xf32>
    %cst_26 = arith.constant dense<0.000000e+00> : vector<2x128xf32>
    %58 = tpu.matmul %36, %8, %cst_26 {dimension_numbers = #tpu.dot_dimension_numbers<[1], [0], [0], [1], [0, 0, 1, 1], [], []>} : vector<2x32xf32>, vector<32x128xf32>, vector<2x128xf32> -> vector<2x128xf32>
    %59 = arith.addf %57, %58 : vector<2x128xf32>
    %60 = arith.negf %59 : vector<2x128xf32>
    %61 = math.exp %60 : vector<2x128xf32>
    %cst_27 = arith.constant 1.000000e+00 : f32
    %62 = vector.broadcast %cst_27 : f32 to vector<2x128xf32>
    %63 = arith.addf %62, %61 : vector<2x128xf32>
    %64 = arith.divf %62, %63 : vector<2x128xf32>
    %65 = math.tanh %59 : vector<2x128xf32>
    %66 = vector.extract_strided_slice %64 {offsets = [0, 0], sizes = [2, 32], strides = [1, 1]} : vector<2x128xf32> to vector<2x32xf32>
    %67 = vector.extract_strided_slice %64 {offsets = [0, 32], sizes = [2, 32], strides = [1, 1]} : vector<2x128xf32> to vector<2x32xf32>
    %68 = vector.extract_strided_slice %65 {offsets = [0, 64], sizes = [2, 32], strides = [1, 1]} : vector<2x128xf32> to vector<2x32xf32>
    %69 = vector.extract_strided_slice %64 {offsets = [0, 96], sizes = [2, 32], strides = [1, 1]} : vector<2x128xf32> to vector<2x32xf32>
    %70 = arith.mulf %67, %34 : vector<2x32xf32>
    %71 = arith.mulf %66, %68 : vector<2x32xf32>
    %72 = arith.addf %70, %71 : vector<2x32xf32>
    %73 = math.tanh %72 : vector<2x32xf32>
    %74 = arith.mulf %69, %73 : vector<2x32xf32>
    %75 = tpu.concatenate %74, %55 in 1 : vector<2x32xf32>, vector<2x32xf32> -> vector<2x64xf32>
    %cst_28 = arith.constant dense<0.000000e+00> : vector<2x128xf32>
    %76 = tpu.matmul %75, %9, %cst_28 {dimension_numbers = #tpu.dot_dimension_numbers<[1], [0], [0], [1], [0, 0, 1, 1], [], []>} : vector<2x64xf32>, vector<64x128xf32>, vector<2x128xf32> -> vector<2x128xf32>
    %77 = vector.broadcast %10 : vector<1x128xf32> to vector<2x128xf32>
    %78 = arith.addf %76, %77 : vector<2x128xf32>
    %79 = arith.negf %78 : vector<2x128xf32>
    %80 = math.exp %79 : vector<2x128xf32>
    %cst_29 = arith.constant 1.000000e+00 : f32
    %81 = vector.broadcast %cst_29 : f32 to vector<2x128xf32>
    %82 = arith.addf %81, %80 : vector<2x128xf32>
    %83 = arith.divf %81, %82 : vector<2x128xf32>
    %84 = math.tanh %78 : vector<2x128xf32>
    %85 = vector.extract_strided_slice %83 {offsets = [0, 0], sizes = [2, 32], strides = [1, 1]} : vector<2x128xf32> to vector<2x32xf32>
    %86 = vector.extract_strided_slice %83 {offsets = [0, 32], sizes = [2, 32], strides = [1, 1]} : vector<2x128xf32> to vector<2x32xf32>
    %87 = vector.extract_strided_slice %84 {offsets = [0, 64], sizes = [2, 32], strides = [1, 1]} : vector<2x128xf32> to vector<2x32xf32>
    %88 = vector.extract_strided_slice %83 {offsets = [0, 96], sizes = [2, 32], strides = [1, 1]} : vector<2x128xf32> to vector<2x32xf32>
    %89 = arith.mulf %86, %53 : vector<2x32xf32>
    %90 = arith.mulf %85, %87 : vector<2x32xf32>
    %91 = arith.addf %89, %90 : vector<2x32xf32>
    %92 = math.tanh %91 : vector<2x32xf32>
    %93 = arith.mulf %88, %92 : vector<2x32xf32>
    %c2 = arith.constant 2 : index
    %c0_30 = arith.constant 0 : index
    %94 = vector.load %arg13[%c2, %c0_30] : memref<16x32xf32, #tpu.memory_space<vmem>>, vector<2x32xf32>
    tpu.vector_store %arg13[%c2, %c0_30], %93 {strides = array<i32>} : memref<16x32xf32, #tpu.memory_space<vmem>>, vector<2x32xf32>,
    %95 = vector.extract_strided_slice %7 {offsets = [4, 0], sizes = [2, 128], strides = [1, 1]} : vector<16x128xf32> to vector<2x128xf32>
    %cst_31 = arith.constant dense<0.000000e+00> : vector<2x128xf32>
    %96 = tpu.matmul %74, %8, %cst_31 {dimension_numbers = #tpu.dot_dimension_numbers<[1], [0], [0], [1], [0, 0, 1, 1], [], []>} : vector<2x32xf32>, vector<32x128xf32>, vector<2x128xf32> -> vector<2x128xf32>
    %97 = arith.addf %95, %96 : vector<2x128xf32>
    %98 = arith.negf %97 : vector<2x128xf32>
    %99 = math.exp %98 : vector<2x128xf32>
    %cst_32 = arith.constant 1.000000e+00 : f32
    %100 = vector.broadcast %cst_32 : f32 to vector<2x128xf32>
    %101 = arith.addf %100, %99 : vector<2x128xf32>
    %102 = arith.divf %100, %101 : vector<2x128xf32>
    %103 = math.tanh %97 : vector<2x128xf32>
    %104 = vector.extract_strided_slice %102 {offsets = [0, 0], sizes = [2, 32], strides = [1, 1]} : vector<2x128xf32> to vector<2x32xf32>
    %105 = vector.extract_strided_slice %102 {offsets = [0, 32], sizes = [2, 32], strides = [1, 1]} : vector<2x128xf32> to vector<2x32xf32>
    %106 = vector.extract_strided_slice %103 {offsets = [0, 64], sizes = [2, 32], strides = [1, 1]} : vector<2x128xf32> to vector<2x32xf32>
    %107 = vector.extract_strided_slice %102 {offsets = [0, 96], sizes = [2, 32], strides = [1, 1]} : vector<2x128xf32> to vector<2x32xf32>
    %108 = arith.mulf %105, %72 : vector<2x32xf32>
    %109 = arith.mulf %104, %106 : vector<2x32xf32>
    %110 = arith.addf %108, %109 : vector<2x32xf32>
    %111 = math.tanh %110 : vector<2x32xf32>
    %112 = arith.mulf %107, %111 : vector<2x32xf32>
    %113 = tpu.concatenate %112, %93 in 1 : vector<2x32xf32>, vector<2x32xf32> -> vector<2x64xf32>
    %cst_33 = arith.constant dense<0.000000e+00> : vector<2x128xf32>
    %114 = tpu.matmul %113, %9, %cst_33 {dimension_numbers = #tpu.dot_dimension_numbers<[1], [0], [0], [1], [0, 0, 1, 1], [], []>} : vector<2x64xf32>, vector<64x128xf32>, vector<2x128xf32> -> vector<2x128xf32>
    %115 = vector.broadcast %10 : vector<1x128xf32> to vector<2x128xf32>
    %116 = arith.addf %114, %115 : vector<2x128xf32>
    %117 = arith.negf %116 : vector<2x128xf32>
    %118 = math.exp %117 : vector<2x128xf32>
    %cst_34 = arith.constant 1.000000e+00 : f32
    %119 = vector.broadcast %cst_34 : f32 to vector<2x128xf32>
    %120 = arith.addf %119, %118 : vector<2x128xf32>
    %121 = arith.divf %119, %120 : vector<2x128xf32>
    %122 = math.tanh %116 : vector<2x128xf32>
    %123 = vector.extract_strided_slice %121 {offsets = [0, 0], sizes = [2, 32], strides = [1, 1]} : vector<2x128xf32> to vector<2x32xf32>
    %124 = vector.extract_strided_slice %121 {offsets = [0, 32], sizes = [2, 32], strides = [1, 1]} : vector<2x128xf32> to vector<2x32xf32>
    %125 = vector.extract_strided_slice %122 {offsets = [0, 64], sizes = [2, 32], strides = [1, 1]} : vector<2x128xf32> to vector<2x32xf32>
    %126 = vector.extract_strided_slice %121 {offsets = [0, 96], sizes = [2, 32], strides = [1, 1]} : vector<2x128xf32> to vector<2x32xf32>
    %127 = arith.mulf %124, %91 : vector<2x32xf32>
    %128 = arith.mulf %123, %125 : vector<2x32xf32>
    %129 = arith.addf %127, %128 : vector<2x32xf32>
    %130 = math.tanh %129 : vector<2x32xf32>
    %131 = arith.mulf %126, %130 : vector<2x32xf32>
    %c4 = arith.constant 4 : index
    %c0_35 = arith.constant 0 : index
    %132 = vector.load %arg13[%c4, %c0_35] : memref<16x32xf32, #tpu.memory_space<vmem>>, vector<2x32xf32>
    tpu.vector_store %arg13[%c4, %c0_35], %131 {strides = array<i32>} : memref<16x32xf32, #tpu.memory_space<vmem>>, vector<2x32xf32>,
    %133 = vector.extract_strided_slice %7 {offsets = [6, 0], sizes = [2, 128], strides = [1, 1]} : vector<16x128xf32> to vector<2x128xf32>
    %cst_36 = arith.constant dense<0.000000e+00> : vector<2x128xf32>
    %134 = tpu.matmul %112, %8, %cst_36 {dimension_numbers = #tpu.dot_dimension_numbers<[1], [0], [0], [1], [0, 0, 1, 1], [], []>} : vector<2x32xf32>, vector<32x128xf32>, vector<2x128xf32> -> vector<2x128xf32>
    %135 = arith.addf %133, %134 : vector<2x128xf32>
    %136 = arith.negf %135 : vector<2x128xf32>
    %137 = math.exp %136 : vector<2x128xf32>
    %cst_37 = arith.constant 1.000000e+00 : f32
    %138 = vector.broadcast %cst_37 : f32 to vector<2x128xf32>
    %139 = arith.addf %138, %137 : vector<2x128xf32>
    %140 = arith.divf %138, %139 : vector<2x128xf32>
    %141 = math.tanh %135 : vector<2x128xf32>
    %142 = vector.extract_strided_slice %140 {offsets = [0, 0], sizes = [2, 32], strides = [1, 1]} : vector<2x128xf32> to vector<2x32xf32>
    %143 = vector.extract_strided_slice %140 {offsets = [0, 32], sizes = [2, 32], strides = [1, 1]} : vector<2x128xf32> to vector<2x32xf32>
    %144 = vector.extract_strided_slice %141 {offsets = [0, 64], sizes = [2, 32], strides = [1, 1]} : vector<2x128xf32> to vector<2x32xf32>
    %145 = vector.extract_strided_slice %140 {offsets = [0, 96], sizes = [2, 32], strides = [1, 1]} : vector<2x128xf32> to vector<2x32xf32>
    %146 = arith.mulf %143, %110 : vector<2x32xf32>
    %147 = arith.mulf %142, %144 : vector<2x32xf32>
    %148 = arith.addf %146, %147 : vector<2x32xf32>
    %149 = math.tanh %148 : vector<2x32xf32>
    %150 = arith.mulf %145, %149 : vector<2x32xf32>
    %151 = tpu.concatenate %150, %131 in 1 : vector<2x32xf32>, vector<2x32xf32> -> vector<2x64xf32>
    %cst_38 = arith.constant dense<0.000000e+00> : vector<2x128xf32>
    %152 = tpu.matmul %151, %9, %cst_38 {dimension_numbers = #tpu.dot_dimension_numbers<[1], [0], [0], [1], [0, 0, 1, 1], [], []>} : vector<2x64xf32>, vector<64x128xf32>, vector<2x128xf32> -> vector<2x128xf32>
    %153 = vector.broadcast %10 : vector<1x128xf32> to vector<2x128xf32>
    %154 = arith.addf %152, %153 : vector<2x128xf32>
    %155 = arith.negf %154 : vector<2x128xf32>
    %156 = math.exp %155 : vector<2x128xf32>
    %cst_39 = arith.constant 1.000000e+00 : f32
    %157 = vector.broadcast %cst_39 : f32 to vector<2x128xf32>
    %158 = arith.addf %157, %156 : vector<2x128xf32>
    %159 = arith.divf %157, %158 : vector<2x128xf32>
    %160 = math.tanh %154 : vector<2x128xf32>
    %161 = vector.extract_strided_slice %159 {offsets = [0, 0], sizes = [2, 32], strides = [1, 1]} : vector<2x128xf32> to vector<2x32xf32>
    %162 = vector.extract_strided_slice %159 {offsets = [0, 32], sizes = [2, 32], strides = [1, 1]} : vector<2x128xf32> to vector<2x32xf32>
    %163 = vector.extract_strided_slice %160 {offsets = [0, 64], sizes = [2, 32], strides = [1, 1]} : vector<2x128xf32> to vector<2x32xf32>
    %164 = vector.extract_strided_slice %159 {offsets = [0, 96], sizes = [2, 32], strides = [1, 1]} : vector<2x128xf32> to vector<2x32xf32>
    %165 = arith.mulf %162, %129 : vector<2x32xf32>
    %166 = arith.mulf %161, %163 : vector<2x32xf32>
    %167 = arith.addf %165, %166 : vector<2x32xf32>
    %168 = math.tanh %167 : vector<2x32xf32>
    %169 = arith.mulf %164, %168 : vector<2x32xf32>
    %c6 = arith.constant 6 : index
    %c0_40 = arith.constant 0 : index
    %170 = vector.load %arg13[%c6, %c0_40] : memref<16x32xf32, #tpu.memory_space<vmem>>, vector<2x32xf32>
    tpu.vector_store %arg13[%c6, %c0_40], %169 {strides = array<i32>} : memref<16x32xf32, #tpu.memory_space<vmem>>, vector<2x32xf32>,
    %171 = vector.extract_strided_slice %7 {offsets = [8, 0], sizes = [2, 128], strides = [1, 1]} : vector<16x128xf32> to vector<2x128xf32>
    %cst_41 = arith.constant dense<0.000000e+00> : vector<2x128xf32>
    %172 = tpu.matmul %150, %8, %cst_41 {dimension_numbers = #tpu.dot_dimension_numbers<[1], [0], [0], [1], [0, 0, 1, 1], [], []>} : vector<2x32xf32>, vector<32x128xf32>, vector<2x128xf32> -> vector<2x128xf32>
    %173 = arith.addf %171, %172 : vector<2x128xf32>
    %174 = arith.negf %173 : vector<2x128xf32>
    %175 = math.exp %174 : vector<2x128xf32>
    %cst_42 = arith.constant 1.000000e+00 : f32
    %176 = vector.broadcast %cst_42 : f32 to vector<2x128xf32>
    %177 = arith.addf %176, %175 : vector<2x128xf32>
    %178 = arith.divf %176, %177 : vector<2x128xf32>
    %179 = math.tanh %173 : vector<2x128xf32>
    %180 = vector.extract_strided_slice %178 {offsets = [0, 0], sizes = [2, 32], strides = [1, 1]} : vector<2x128xf32> to vector<2x32xf32>
    %181 = vector.extract_strided_slice %178 {offsets = [0, 32], sizes = [2, 32], strides = [1, 1]} : vector<2x128xf32> to vector<2x32xf32>
    %182 = vector.extract_strided_slice %179 {offsets = [0, 64], sizes = [2, 32], strides = [1, 1]} : vector<2x128xf32> to vector<2x32xf32>
    %183 = vector.extract_strided_slice %178 {offsets = [0, 96], sizes = [2, 32], strides = [1, 1]} : vector<2x128xf32> to vector<2x32xf32>
    %184 = arith.mulf %181, %148 : vector<2x32xf32>
    %185 = arith.mulf %180, %182 : vector<2x32xf32>
    %186 = arith.addf %184, %185 : vector<2x32xf32>
    %187 = math.tanh %186 : vector<2x32xf32>
    %188 = arith.mulf %183, %187 : vector<2x32xf32>
    %189 = tpu.concatenate %188, %169 in 1 : vector<2x32xf32>, vector<2x32xf32> -> vector<2x64xf32>
    %cst_43 = arith.constant dense<0.000000e+00> : vector<2x128xf32>
    %190 = tpu.matmul %189, %9, %cst_43 {dimension_numbers = #tpu.dot_dimension_numbers<[1], [0], [0], [1], [0, 0, 1, 1], [], []>} : vector<2x64xf32>, vector<64x128xf32>, vector<2x128xf32> -> vector<2x128xf32>
    %191 = vector.broadcast %10 : vector<1x128xf32> to vector<2x128xf32>
    %192 = arith.addf %190, %191 : vector<2x128xf32>
    %193 = arith.negf %192 : vector<2x128xf32>
    %194 = math.exp %193 : vector<2x128xf32>
    %cst_44 = arith.constant 1.000000e+00 : f32
    %195 = vector.broadcast %cst_44 : f32 to vector<2x128xf32>
    %196 = arith.addf %195, %194 : vector<2x128xf32>
    %197 = arith.divf %195, %196 : vector<2x128xf32>
    %198 = math.tanh %192 : vector<2x128xf32>
    %199 = vector.extract_strided_slice %197 {offsets = [0, 0], sizes = [2, 32], strides = [1, 1]} : vector<2x128xf32> to vector<2x32xf32>
    %200 = vector.extract_strided_slice %197 {offsets = [0, 32], sizes = [2, 32], strides = [1, 1]} : vector<2x128xf32> to vector<2x32xf32>
    %201 = vector.extract_strided_slice %198 {offsets = [0, 64], sizes = [2, 32], strides = [1, 1]} : vector<2x128xf32> to vector<2x32xf32>
    %202 = vector.extract_strided_slice %197 {offsets = [0, 96], sizes = [2, 32], strides = [1, 1]} : vector<2x128xf32> to vector<2x32xf32>
    %203 = arith.mulf %200, %167 : vector<2x32xf32>
    %204 = arith.mulf %199, %201 : vector<2x32xf32>
    %205 = arith.addf %203, %204 : vector<2x32xf32>
    %206 = math.tanh %205 : vector<2x32xf32>
    %207 = arith.mulf %202, %206 : vector<2x32xf32>
    %c8 = arith.constant 8 : index
    %c0_45 = arith.constant 0 : index
    %208 = vector.load %arg13[%c8, %c0_45] : memref<16x32xf32, #tpu.memory_space<vmem>>, vector<2x32xf32>
    tpu.vector_store %arg13[%c8, %c0_45], %207 {strides = array<i32>} : memref<16x32xf32, #tpu.memory_space<vmem>>, vector<2x32xf32>,
    %209 = vector.extract_strided_slice %7 {offsets = [10, 0], sizes = [2, 128], strides = [1, 1]} : vector<16x128xf32> to vector<2x128xf32>
    %cst_46 = arith.constant dense<0.000000e+00> : vector<2x128xf32>
    %210 = tpu.matmul %188, %8, %cst_46 {dimension_numbers = #tpu.dot_dimension_numbers<[1], [0], [0], [1], [0, 0, 1, 1], [], []>} : vector<2x32xf32>, vector<32x128xf32>, vector<2x128xf32> -> vector<2x128xf32>
    %211 = arith.addf %209, %210 : vector<2x128xf32>
    %212 = arith.negf %211 : vector<2x128xf32>
    %213 = math.exp %212 : vector<2x128xf32>
    %cst_47 = arith.constant 1.000000e+00 : f32
    %214 = vector.broadcast %cst_47 : f32 to vector<2x128xf32>
    %215 = arith.addf %214, %213 : vector<2x128xf32>
    %216 = arith.divf %214, %215 : vector<2x128xf32>
    %217 = math.tanh %211 : vector<2x128xf32>
    %218 = vector.extract_strided_slice %216 {offsets = [0, 0], sizes = [2, 32], strides = [1, 1]} : vector<2x128xf32> to vector<2x32xf32>
    %219 = vector.extract_strided_slice %216 {offsets = [0, 32], sizes = [2, 32], strides = [1, 1]} : vector<2x128xf32> to vector<2x32xf32>
    %220 = vector.extract_strided_slice %217 {offsets = [0, 64], sizes = [2, 32], strides = [1, 1]} : vector<2x128xf32> to vector<2x32xf32>
    %221 = vector.extract_strided_slice %216 {offsets = [0, 96], sizes = [2, 32], strides = [1, 1]} : vector<2x128xf32> to vector<2x32xf32>
    %222 = arith.mulf %219, %186 : vector<2x32xf32>
    %223 = arith.mulf %218, %220 : vector<2x32xf32>
    %224 = arith.addf %222, %223 : vector<2x32xf32>
    %225 = math.tanh %224 : vector<2x32xf32>
    %226 = arith.mulf %221, %225 : vector<2x32xf32>
    %227 = tpu.concatenate %226, %207 in 1 : vector<2x32xf32>, vector<2x32xf32> -> vector<2x64xf32>
    %cst_48 = arith.constant dense<0.000000e+00> : vector<2x128xf32>
    %228 = tpu.matmul %227, %9, %cst_48 {dimension_numbers = #tpu.dot_dimension_numbers<[1], [0], [0], [1], [0, 0, 1, 1], [], []>} : vector<2x64xf32>, vector<64x128xf32>, vector<2x128xf32> -> vector<2x128xf32>
    %229 = vector.broadcast %10 : vector<1x128xf32> to vector<2x128xf32>
    %230 = arith.addf %228, %229 : vector<2x128xf32>
    %231 = arith.negf %230 : vector<2x128xf32>
    %232 = math.exp %231 : vector<2x128xf32>
    %cst_49 = arith.constant 1.000000e+00 : f32
    %233 = vector.broadcast %cst_49 : f32 to vector<2x128xf32>
    %234 = arith.addf %233, %232 : vector<2x128xf32>
    %235 = arith.divf %233, %234 : vector<2x128xf32>
    %236 = math.tanh %230 : vector<2x128xf32>
    %237 = vector.extract_strided_slice %235 {offsets = [0, 0], sizes = [2, 32], strides = [1, 1]} : vector<2x128xf32> to vector<2x32xf32>
    %238 = vector.extract_strided_slice %235 {offsets = [0, 32], sizes = [2, 32], strides = [1, 1]} : vector<2x128xf32> to vector<2x32xf32>
    %239 = vector.extract_strided_slice %236 {offsets = [0, 64], sizes = [2, 32], strides = [1, 1]} : vector<2x128xf32> to vector<2x32xf32>
    %240 = vector.extract_strided_slice %235 {offsets = [0, 96], sizes = [2, 32], strides = [1, 1]} : vector<2x128xf32> to vector<2x32xf32>
    %241 = arith.mulf %238, %205 : vector<2x32xf32>
    %242 = arith.mulf %237, %239 : vector<2x32xf32>
    %243 = arith.addf %241, %242 : vector<2x32xf32>
    %244 = math.tanh %243 : vector<2x32xf32>
    %245 = arith.mulf %240, %244 : vector<2x32xf32>
    %c10 = arith.constant 10 : index
    %c0_50 = arith.constant 0 : index
    %246 = vector.load %arg13[%c10, %c0_50] : memref<16x32xf32, #tpu.memory_space<vmem>>, vector<2x32xf32>
    tpu.vector_store %arg13[%c10, %c0_50], %245 {strides = array<i32>} : memref<16x32xf32, #tpu.memory_space<vmem>>, vector<2x32xf32>,
    %247 = vector.extract_strided_slice %7 {offsets = [12, 0], sizes = [2, 128], strides = [1, 1]} : vector<16x128xf32> to vector<2x128xf32>
    %cst_51 = arith.constant dense<0.000000e+00> : vector<2x128xf32>
    %248 = tpu.matmul %226, %8, %cst_51 {dimension_numbers = #tpu.dot_dimension_numbers<[1], [0], [0], [1], [0, 0, 1, 1], [], []>} : vector<2x32xf32>, vector<32x128xf32>, vector<2x128xf32> -> vector<2x128xf32>
    %249 = arith.addf %247, %248 : vector<2x128xf32>
    %250 = arith.negf %249 : vector<2x128xf32>
    %251 = math.exp %250 : vector<2x128xf32>
    %cst_52 = arith.constant 1.000000e+00 : f32
    %252 = vector.broadcast %cst_52 : f32 to vector<2x128xf32>
    %253 = arith.addf %252, %251 : vector<2x128xf32>
    %254 = arith.divf %252, %253 : vector<2x128xf32>
    %255 = math.tanh %249 : vector<2x128xf32>
    %256 = vector.extract_strided_slice %254 {offsets = [0, 0], sizes = [2, 32], strides = [1, 1]} : vector<2x128xf32> to vector<2x32xf32>
    %257 = vector.extract_strided_slice %254 {offsets = [0, 32], sizes = [2, 32], strides = [1, 1]} : vector<2x128xf32> to vector<2x32xf32>
    %258 = vector.extract_strided_slice %255 {offsets = [0, 64], sizes = [2, 32], strides = [1, 1]} : vector<2x128xf32> to vector<2x32xf32>
    %259 = vector.extract_strided_slice %254 {offsets = [0, 96], sizes = [2, 32], strides = [1, 1]} : vector<2x128xf32> to vector<2x32xf32>
    %260 = arith.mulf %257, %224 : vector<2x32xf32>
    %261 = arith.mulf %256, %258 : vector<2x32xf32>
    %262 = arith.addf %260, %261 : vector<2x32xf32>
    %263 = math.tanh %262 : vector<2x32xf32>
    %264 = arith.mulf %259, %263 : vector<2x32xf32>
    %265 = tpu.concatenate %264, %245 in 1 : vector<2x32xf32>, vector<2x32xf32> -> vector<2x64xf32>
    %cst_53 = arith.constant dense<0.000000e+00> : vector<2x128xf32>
    %266 = tpu.matmul %265, %9, %cst_53 {dimension_numbers = #tpu.dot_dimension_numbers<[1], [0], [0], [1], [0, 0, 1, 1], [], []>} : vector<2x64xf32>, vector<64x128xf32>, vector<2x128xf32> -> vector<2x128xf32>
    %267 = vector.broadcast %10 : vector<1x128xf32> to vector<2x128xf32>
    %268 = arith.addf %266, %267 : vector<2x128xf32>
    %269 = arith.negf %268 : vector<2x128xf32>
    %270 = math.exp %269 : vector<2x128xf32>
    %cst_54 = arith.constant 1.000000e+00 : f32
    %271 = vector.broadcast %cst_54 : f32 to vector<2x128xf32>
    %272 = arith.addf %271, %270 : vector<2x128xf32>
    %273 = arith.divf %271, %272 : vector<2x128xf32>
    %274 = math.tanh %268 : vector<2x128xf32>
    %275 = vector.extract_strided_slice %273 {offsets = [0, 0], sizes = [2, 32], strides = [1, 1]} : vector<2x128xf32> to vector<2x32xf32>
    %276 = vector.extract_strided_slice %273 {offsets = [0, 32], sizes = [2, 32], strides = [1, 1]} : vector<2x128xf32> to vector<2x32xf32>
    %277 = vector.extract_strided_slice %274 {offsets = [0, 64], sizes = [2, 32], strides = [1, 1]} : vector<2x128xf32> to vector<2x32xf32>
    %278 = vector.extract_strided_slice %273 {offsets = [0, 96], sizes = [2, 32], strides = [1, 1]} : vector<2x128xf32> to vector<2x32xf32>
    %279 = arith.mulf %276, %243 : vector<2x32xf32>
    %280 = arith.mulf %275, %277 : vector<2x32xf32>
    %281 = arith.addf %279, %280 : vector<2x32xf32>
    %282 = math.tanh %281 : vector<2x32xf32>
    %283 = arith.mulf %278, %282 : vector<2x32xf32>
    %c12 = arith.constant 12 : index
    %c0_55 = arith.constant 0 : index
    %284 = vector.load %arg13[%c12, %c0_55] : memref<16x32xf32, #tpu.memory_space<vmem>>, vector<2x32xf32>
    tpu.vector_store %arg13[%c12, %c0_55], %283 {strides = array<i32>} : memref<16x32xf32, #tpu.memory_space<vmem>>, vector<2x32xf32>,
    %285 = vector.extract_strided_slice %7 {offsets = [14, 0], sizes = [2, 128], strides = [1, 1]} : vector<16x128xf32> to vector<2x128xf32>
    %cst_56 = arith.constant dense<0.000000e+00> : vector<2x128xf32>
    %286 = tpu.matmul %264, %8, %cst_56 {dimension_numbers = #tpu.dot_dimension_numbers<[1], [0], [0], [1], [0, 0, 1, 1], [], []>} : vector<2x32xf32>, vector<32x128xf32>, vector<2x128xf32> -> vector<2x128xf32>
    %287 = arith.addf %285, %286 : vector<2x128xf32>
    %288 = arith.negf %287 : vector<2x128xf32>
    %289 = math.exp %288 : vector<2x128xf32>
    %cst_57 = arith.constant 1.000000e+00 : f32
    %290 = vector.broadcast %cst_57 : f32 to vector<2x128xf32>
    %291 = arith.addf %290, %289 : vector<2x128xf32>
    %292 = arith.divf %290, %291 : vector<2x128xf32>
    %293 = math.tanh %287 : vector<2x128xf32>
    %294 = vector.extract_strided_slice %292 {offsets = [0, 0], sizes = [2, 32], strides = [1, 1]} : vector<2x128xf32> to vector<2x32xf32>
    %295 = vector.extract_strided_slice %292 {offsets = [0, 32], sizes = [2, 32], strides = [1, 1]} : vector<2x128xf32> to vector<2x32xf32>
    %296 = vector.extract_strided_slice %293 {offsets = [0, 64], sizes = [2, 32], strides = [1, 1]} : vector<2x128xf32> to vector<2x32xf32>
    %297 = vector.extract_strided_slice %292 {offsets = [0, 96], sizes = [2, 32], strides = [1, 1]} : vector<2x128xf32> to vector<2x32xf32>
    %298 = arith.mulf %295, %262 : vector<2x32xf32>
    %299 = arith.mulf %294, %296 : vector<2x32xf32>
    %300 = arith.addf %298, %299 : vector<2x32xf32>
    %301 = math.tanh %300 : vector<2x32xf32>
    %302 = arith.mulf %297, %301 : vector<2x32xf32>
    %303 = tpu.concatenate %302, %283 in 1 : vector<2x32xf32>, vector<2x32xf32> -> vector<2x64xf32>
    %cst_58 = arith.constant dense<0.000000e+00> : vector<2x128xf32>
    %304 = tpu.matmul %303, %9, %cst_58 {dimension_numbers = #tpu.dot_dimension_numbers<[1], [0], [0], [1], [0, 0, 1, 1], [], []>} : vector<2x64xf32>, vector<64x128xf32>, vector<2x128xf32> -> vector<2x128xf32>
    %305 = vector.broadcast %10 : vector<1x128xf32> to vector<2x128xf32>
    %306 = arith.addf %304, %305 : vector<2x128xf32>
    %307 = arith.negf %306 : vector<2x128xf32>
    %308 = math.exp %307 : vector<2x128xf32>
    %cst_59 = arith.constant 1.000000e+00 : f32
    %309 = vector.broadcast %cst_59 : f32 to vector<2x128xf32>
    %310 = arith.addf %309, %308 : vector<2x128xf32>
    %311 = arith.divf %309, %310 : vector<2x128xf32>
    %312 = math.tanh %306 : vector<2x128xf32>
    %313 = vector.extract_strided_slice %311 {offsets = [0, 0], sizes = [2, 32], strides = [1, 1]} : vector<2x128xf32> to vector<2x32xf32>
    %314 = vector.extract_strided_slice %311 {offsets = [0, 32], sizes = [2, 32], strides = [1, 1]} : vector<2x128xf32> to vector<2x32xf32>
    %315 = vector.extract_strided_slice %312 {offsets = [0, 64], sizes = [2, 32], strides = [1, 1]} : vector<2x128xf32> to vector<2x32xf32>
    %316 = vector.extract_strided_slice %311 {offsets = [0, 96], sizes = [2, 32], strides = [1, 1]} : vector<2x128xf32> to vector<2x32xf32>
    %317 = arith.mulf %314, %281 : vector<2x32xf32>
    %318 = arith.mulf %313, %315 : vector<2x32xf32>
    %319 = arith.addf %317, %318 : vector<2x32xf32>
    %320 = math.tanh %319 : vector<2x32xf32>
    %321 = arith.mulf %316, %320 : vector<2x32xf32>
    %c14 = arith.constant 14 : index
    %c0_60 = arith.constant 0 : index
    %322 = vector.load %arg13[%c14, %c0_60] : memref<16x32xf32, #tpu.memory_space<vmem>>, vector<2x32xf32>
    tpu.vector_store %arg13[%c14, %c0_60], %321 {strides = array<i32>} : memref<16x32xf32, #tpu.memory_space<vmem>>, vector<2x32xf32>,
    %c0_61 = arith.constant 0 : index
    %c0_62 = arith.constant 0 : index
    %323 = vector.load %arg13[%c0_61, %c0_62] : memref<16x32xf32, #tpu.memory_space<vmem>>, vector<16x32xf32>
    %c0_63 = arith.constant 0 : index
    %c0_64 = arith.constant 0 : index
    %324 = vector.load %arg8[%c0_63, %c0_64] : memref<32x128xf32, #tpu.memory_space<vmem>>, vector<32x128xf32>
    %cst_65 = arith.constant dense<0.000000e+00> : vector<16x128xf32>
    %325 = tpu.matmul %323, %324, %cst_65 {dimension_numbers = #tpu.dot_dimension_numbers<[1], [0], [0], [1], [0, 0, 1, 1], [], []>} : vector<16x32xf32>, vector<32x128xf32>, vector<16x128xf32> -> vector<16x128xf32>
    %c0_66 = arith.constant 0 : index
    %c0_67 = arith.constant 0 : index
    %326 = vector.load %arg9[%c0_66, %c0_67] : memref<1x128xf32, #tpu.memory_space<vmem>>, vector<1x128xf32>
    %327 = vector.broadcast %326 : vector<1x128xf32> to vector<16x128xf32>
    %328 = arith.addf %325, %327 : vector<16x128xf32>
    %c0_68 = arith.constant 0 : index
    %c0_69 = arith.constant 0 : index
    %329 = vector.load %arg10[%c0_68, %c0_69] : memref<16x128xf32, #tpu.memory_space<vmem>>, vector<16x128xf32>
    tpu.vector_store %arg10[%c0_68, %c0_69], %328 {strides = array<i32>} : memref<16x128xf32, #tpu.memory_space<vmem>>, vector<16x128xf32>,
    %c0_70 = arith.constant 0 : index
    %c0_71 = arith.constant 0 : index
    %c0_72 = arith.constant 0 : index
    %330 = vector.load %arg11[%c0_70, %c0_71, %c0_72] : memref<2x2x32xf32, #tpu.memory_space<vmem>>, vector<1x2x32xf32>
    %331 = vector.shape_cast %330 : vector<1x2x32xf32> to vector<2x32xf32>
    %332 = vector.shape_cast %302 : vector<2x32xf32> to vector<1x2x32xf32>
    tpu.vector_store %arg11[%c0_70, %c0_71, %c0_72], %332 {strides = array<i32>} : memref<2x2x32xf32, #tpu.memory_space<vmem>>, vector<1x2x32xf32>,
    %c1_73 = arith.constant 1 : index
    %c0_74 = arith.constant 0 : index
    %c0_75 = arith.constant 0 : index
    %333 = vector.load %arg11[%c1_73, %c0_74, %c0_75] : memref<2x2x32xf32, #tpu.memory_space<vmem>>, vector<1x2x32xf32>
    %334 = vector.shape_cast %333 : vector<1x2x32xf32> to vector<2x32xf32>
    %335 = vector.shape_cast %321 : vector<2x32xf32> to vector<1x2x32xf32>
    tpu.vector_store %arg11[%c1_73, %c0_74, %c0_75], %335 {strides = array<i32>} : memref<2x2x32xf32, #tpu.memory_space<vmem>>, vector<1x2x32xf32>,
    %c0_76 = arith.constant 0 : index
    %c0_77 = arith.constant 0 : index
    %c0_78 = arith.constant 0 : index
    %336 = vector.load %arg12[%c0_76, %c0_77, %c0_78] : memref<2x2x32xf32, #tpu.memory_space<vmem>>, vector<1x2x32xf32>
    %337 = vector.shape_cast %336 : vector<1x2x32xf32> to vector<2x32xf32>
    %338 = vector.shape_cast %300 : vector<2x32xf32> to vector<1x2x32xf32>
    tpu.vector_store %arg12[%c0_76, %c0_77, %c0_78], %338 {strides = array<i32>} : memref<2x2x32xf32, #tpu.memory_space<vmem>>, vector<1x2x32xf32>,
    %c1_79 = arith.constant 1 : index
    %c0_80 = arith.constant 0 : index
    %c0_81 = arith.constant 0 : index
    %339 = vector.load %arg12[%c1_79, %c0_80, %c0_81] : memref<2x2x32xf32, #tpu.memory_space<vmem>>, vector<1x2x32xf32>
    %340 = vector.shape_cast %339 : vector<1x2x32xf32> to vector<2x32xf32>
    %341 = vector.shape_cast %319 : vector<2x32xf32> to vector<1x2x32xf32>
    tpu.vector_store %arg12[%c1_79, %c0_80, %c0_81], %341 {strides = array<i32>} : memref<2x2x32xf32, #tpu.memory_space<vmem>>, vector<1x2x32xf32>,
    return
  }
  func.func @transform_0(%arg0: i32) -> (i32, i32) {
    %c0_i32 = arith.constant 0 : i32
    %c0_i32_0 = arith.constant 0 : i32
    %c0_i32_1 = arith.constant 0 : i32
    return %c0_i32, %c0_i32_0 : i32, i32
  }
  func.func @transform_1(%arg0: i32) -> (i32, i32, i32) {
    %c0_i32 = arith.constant 0 : i32
    %c0_i32_0 = arith.constant 0 : i32
    %c0_i32_1 = arith.constant 0 : i32
    %c0_i32_2 = arith.constant 0 : i32
    return %c0_i32, %c0_i32_0, %c0_i32_1 : i32, i32, i32
  }
  func.func @transform_2(%arg0: i32) -> (i32, i32, i32) {
    %c0_i32 = arith.constant 0 : i32
    %c0_i32_0 = arith.constant 0 : i32
    %c0_i32_1 = arith.constant 0 : i32
    %c0_i32_2 = arith.constant 0 : i32
    return %c0_i32, %c0_i32_0, %c0_i32_1 : i32, i32, i32
  }
  func.func @transform_3(%arg0: i32) -> (i32, i32) {
    %c0_i32 = arith.constant 0 : i32
    %c0_i32_0 = arith.constant 0 : i32
    %c0_i32_1 = arith.constant 0 : i32
    return %c0_i32, %c0_i32_0 : i32, i32
  }
  func.func @transform_4(%arg0: i32) -> (i32, i32) {
    %c0_i32 = arith.constant 0 : i32
    %c0_i32_0 = arith.constant 0 : i32
    %c0_i32_1 = arith.constant 0 : i32
    return %c0_i32, %c0_i32_0 : i32, i32
  }
  func.func @transform_5(%arg0: i32) -> (i32, i32) {
    %c0_i32 = arith.constant 0 : i32
    %c0_i32_0 = arith.constant 0 : i32
    %c0_i32_1 = arith.constant 0 : i32
    return %c0_i32, %c0_i32_0 : i32, i32
  }
  func.func @transform_6(%arg0: i32) -> (i32, i32) {
    %c0_i32 = arith.constant 0 : i32
    %c0_i32_0 = arith.constant 0 : i32
    %c0_i32_1 = arith.constant 0 : i32
    return %c0_i32, %c0_i32_0 : i32, i32
  }
  func.func @transform_7(%arg0: i32) -> (i32, i32) {
    %c0_i32 = arith.constant 0 : i32
    %c0_i32_0 = arith.constant 0 : i32
    %c0_i32_1 = arith.constant 0 : i32
    return %c0_i32, %c0_i32_0 : i32, i32
  }
  func.func @transform_8(%arg0: i32) -> (i32, i32) {
    %c0_i32 = arith.constant 0 : i32
    %c0_i32_0 = arith.constant 0 : i32
    %c0_i32_1 = arith.constant 0 : i32
    return %c0_i32, %c0_i32_0 : i32, i32
  }
  func.func @transform_9(%arg0: i32) -> (i32, i32) {
    %c0_i32 = arith.constant 0 : i32
    %c0_i32_0 = arith.constant 0 : i32
    %c0_i32_1 = arith.constant 0 : i32
    return %c0_i32, %c0_i32_0 : i32, i32
  }
  func.func @transform_10(%arg0: i32) -> (i32, i32, i32) {
    %c0_i32 = arith.constant 0 : i32
    %c0_i32_0 = arith.constant 0 : i32
    %c0_i32_1 = arith.constant 0 : i32
    %c0_i32_2 = arith.constant 0 : i32
    return %c0_i32, %c0_i32_0, %c0_i32_1 : i32, i32, i32
  }
  func.func @transform_11(%arg0: i32) -> (i32, i32, i32) {
    %c0_i32 = arith.constant 0 : i32
    %c0_i32_0 = arith.constant 0 : i32
    %c0_i32_1 = arith.constant 0 : i32
    %c0_i32_2 = arith.constant 0 : i32
    return %c0_i32, %c0_i32_0, %c0_i32_1 : i32, i32, i32
  }
}

</mosaic_0001>

<llo_original>
// kernel: lstm_language_model_forward.1
$region0: #{lstm_language_model_forward.1}
  #allocation0 [shape = 'u32[]', space=smem, size = 0x4, offset = 0x4, fixed_abs, tag = 'smem constant byte address 0x4 - core index']
  #allocation1 [shape = 'u32[72,128]{1,0:T(1,128)}', space=vmem, size = 0x9000, scoped, tag = 'internal scratch']
  #allocation2 [shape = 'f32[16,32]{1,0:T(8,128)}', space=vmem, size = 0x2000, scoped, tag = 'scratch operand']
  %s0 = inlined_call_operand.vmem [shape: s32[16,1], index: 0, kind: input, shape index: {}]
  %s1 = inlined_call_operand.vmem [shape: f32[2,2,32], index: 1, kind: input, shape index: {}]
  %s2 = inlined_call_operand.vmem [shape: f32[2,2,32], index: 2, kind: input, shape index: {}]
  %s3 = inlined_call_operand.hbm [shape: f32[64,128], index: 3, kind: input, shape index: {}]
  %s4 = inlined_call_operand.vmem [shape: f32[32,128], index: 4, kind: input, shape index: {}]
  %s5 = inlined_call_operand.hbm [shape: f32[64,128], index: 5, kind: input, shape index: {}]
  %s6 = inlined_call_operand.vmem [shape: f32[1,128], index: 6, kind: input, shape index: {}]
  %s7 = inlined_call_operand.hbm [shape: f32[32,128], index: 7, kind: input, shape index: {}]
  %s8 = inlined_call_operand.hbm [shape: f32[1,128], index: 8, kind: input, shape index: {}]
  %s9 = inlined_call_operand.vmem [shape: f32[16,128], index: 9, kind: output, shape index: {0}]
  %s10 = inlined_call_operand.hbm [shape: f32[2,2,32], index: 10, kind: output, shape index: {1}]
  %s11 = inlined_call_operand.hbm [shape: f32[2,2,32], index: 11, kind: output, shape index: {2}]
  %12 = xla_tuple %s9, %s10, %s11
  %s13 = sld [smem:[#allocation0]]
  $region78: #{lstm_language_model_forward.1} parent=0
    _
  %s15 = ssub.s32 1, %s13
  %s16 = scalar_select 0, %s15, %s13
  $region1: #{lstm_language_model_forward.1} parent=0
    #allocation3 [shape = 'u8[32768]{0}', space=vmem, size = 0x8000, scoped, tag = 'input window, operand 3, single buffered']
    #allocation4 [shape = 's32[1]{0}', space=sflag, size = 0x4, scoped, tag = 'scoped memory for lstm_language_model_forward.1']
    #allocation5 [shape = 's32[1]{0}', space=sflag, size = 0x4, scoped, tag = 'scoped memory for lstm_language_model_forward.1']
    #allocation6 [shape = 'u8[32768]{0}', space=vmem, size = 0x8000, scoped, tag = 'input window, operand 5, single buffered']
    #allocation7 [shape = 's32[1]{0}', space=sflag, size = 0x4, scoped, tag = 'scoped memory for lstm_language_model_forward.1']
    #allocation8 [shape = 'u8[16384]{0}', space=vmem, size = 0x4000, scoped, tag = 'input window, operand 7, single buffered']
    #allocation9 [shape = 'u8[512]{0}', space=vmem, size = 0x400, scoped, tag = 'input window, operand 8, single buffered']
    #allocation10 [shape = 's32[1]{0}', space=sflag, size = 0x4, scoped, tag = 'scoped memory for lstm_language_model_forward.1']
    #allocation11 [shape = 'u8[2048]{0}', space=vmem, size = 0x800, scoped, tag = 'output window, operand 1, single buffered']
    #allocation12 [shape = 'u8[2048]{0}', space=vmem, size = 0x800, scoped, tag = 'output window, operand 2, single buffered']
    #allocation13 [shape = 's32[1]{0}', space=sflag, size = 0x4, scoped, tag = 'scoped memory for lstm_language_model_forward.1']
    %17 = vsyncpa [#allocation4], 0
    %18 = vsyncpa [#allocation7], 0
    %19 = vsyncpa [#allocation10], 0
    %20 = vsyncpa [#allocation5], 0
    %21 = vsyncpa [#allocation13], 0
    // Predicated region
    $region2: #{lstm_language_model_forward.1} parent=1 // pred_check
      _
    $region3: #{lstm_language_model_forward.1} parent=1 // pred_check_branch
      %23 = sbr.rel (0) target = $region5
    $region4: #{lstm_language_model_forward.1} parent=1 // pred_region
      _
    $region5: #{lstm_language_model_forward.1} parent=1 // pred_fallthru
      _
    // Predicated region
    $region6: #{lstm_language_model_forward.1} parent=1 // pred_check
      _
    $region7: #{lstm_language_model_forward.1} parent=1 // pred_check_branch
      %25 = sbr.rel (0) target = $region9
    $region8: #{lstm_language_model_forward.1} parent=1 // pred_region
      _
    $region9: #{lstm_language_model_forward.1} parent=1 // pred_fallthru
      _
    // Predicated region
    $region10: #{lstm_language_model_forward.1} parent=1 // pred_check
      _
    $region11: #{lstm_language_model_forward.1} parent=1 // pred_check_branch
      %27 = sbr.rel (0) target = $region13
    $region12: #{lstm_language_model_forward.1} parent=1 // pred_region
      _
    $region13: #{lstm_language_model_forward.1} parent=1 // pred_fallthru
      _
    // Predicated region
    $region14: #{lstm_language_model_forward.1} parent=1 // pred_check
      _
    $region15: #{lstm_language_model_forward.1} parent=1 // pred_check_branch
      %29 = sbr.rel (0) target = $region17
    $region16: #{lstm_language_model_forward.1} parent=1 // pred_region
      %31 = vsyncadd [#allocation4], 0
      %s32 = sshll.u32 %s3, 4
      %s33 = int_to_ptr.hbm [resolvable:$true] %s32
      %s34 = sshll.u32 [#allocation3], 4
      %s35 = int_to_ptr.vmem [resolvable:$true] %s34
      %40 = dma.hbm_to_vmem [thread:$0]  %s33, 1024, %s35, [#allocation4], 128, 128, 8
    $region17: #{lstm_language_model_forward.1} parent=1 // pred_fallthru
      _
    // Predicated region
    $region18: #{lstm_language_model_forward.1} parent=1 // pred_check
      _
    $region19: #{lstm_language_model_forward.1} parent=1 // pred_check_branch
      %42 = sbr.rel (0) target = $region21
    $region20: #{lstm_language_model_forward.1} parent=1 // pred_region
      _
    $region21: #{lstm_language_model_forward.1} parent=1 // pred_fallthru
      _
    // Predicated region
    $region22: #{lstm_language_model_forward.1} parent=1 // pred_check
      _
    $region23: #{lstm_language_model_forward.1} parent=1 // pred_check_branch
      %44 = sbr.rel (0) target = $region25
    $region24: #{lstm_language_model_forward.1} parent=1 // pred_region
      %46 = vsyncadd [#allocation7], 0
      %s47 = sshll.u32 %s5, 4
      %s48 = int_to_ptr.hbm [resolvable:$true] %s47
      %s49 = sshll.u32 [#allocation6], 4
      %s50 = int_to_ptr.vmem [resolvable:$true] %s49
      %55 = dma.hbm_to_vmem [thread:$0]  %s48, 1024, %s50, [#allocation7], 128, 128, 8
    $region25: #{lstm_language_model_forward.1} parent=1 // pred_fallthru
      _
    // Predicated region
    $region26: #{lstm_language_model_forward.1} parent=1 // pred_check
      _
    $region27: #{lstm_language_model_forward.1} parent=1 // pred_check_branch
      %57 = sbr.rel (0) target = $region29
    $region28: #{lstm_language_model_forward.1} parent=1 // pred_region
      _
    $region29: #{lstm_language_model_forward.1} parent=1 // pred_fallthru
      _
    // Predicated region
    $region30: #{lstm_language_model_forward.1} parent=1 // pred_check
      _
    $region31: #{lstm_language_model_forward.1} parent=1 // pred_check_branch
      %59 = sbr.rel (0) target = $region33
    $region32: #{lstm_language_model_forward.1} parent=1 // pred_region
      %61 = vsyncadd [#allocation7], 0
      %s62 = sshll.u32 %s7, 4
      %s63 = int_to_ptr.hbm [resolvable:$true] %s62
      %s64 = sshll.u32 [#allocation8], 4
      %s65 = int_to_ptr.vmem [resolvable:$true] %s64
      %70 = dma.hbm_to_vmem [thread:$0]  %s63, 512, %s65, [#allocation7], 128, 128, 8
    $region33: #{lstm_language_model_forward.1} parent=1 // pred_fallthru
      _
    // Predicated region
    $region34: #{lstm_language_model_forward.1} parent=1 // pred_check
      _
    $region35: #{lstm_language_model_forward.1} parent=1 // pred_check_branch
      %72 = sbr.rel (0) target = $region37
    $region36: #{lstm_language_model_forward.1} parent=1 // pred_region
      %74 = vsyncadd [#allocation10], 0
      %s76 = sshll.u32 %s8, 4
      %s77 = int_to_ptr.hbm [resolvable:$true] %s76
      %s78 = sshll.u32 [#allocation9], 4
      %s79 = int_to_ptr.vmem [resolvable:$true] %s78
      %81 = dma.hbm_to_vmem [thread:$0]  %s77, 16, %s79, [#allocation10]
    $region37: #{lstm_language_model_forward.1} parent=1 // pred_fallthru
      _
    // Predicated region
    $region38: #{lstm_language_model_forward.1} parent=1 // pred_check
      _
    $region39: #{lstm_language_model_forward.1} parent=1 // pred_check_branch
      %83 = sbr.rel (0) target = $region41
    $region40: #{lstm_language_model_forward.1} parent=1 // pred_region
      %85 = dma.done [#allocation4], 1024
    $region41: #{lstm_language_model_forward.1} parent=1 // pred_fallthru
      _
    // Predicated region
    $region42: #{lstm_language_model_forward.1} parent=1 // pred_check
      _
    $region43: #{lstm_language_model_forward.1} parent=1 // pred_check_branch
      %87 = sbr.rel (0) target = $region45
    $region44: #{lstm_language_model_forward.1} parent=1 // pred_region
      %89 = dma.done [#allocation7], 1024
    $region45: #{lstm_language_model_forward.1} parent=1 // pred_fallthru
      _
    // Predicated region
    $region46: #{lstm_language_model_forward.1} parent=1 // pred_check
      _
    $region47: #{lstm_language_model_forward.1} parent=1 // pred_check_branch
      %91 = sbr.rel (0) target = $region49
    $region48: #{lstm_language_model_forward.1} parent=1 // pred_region
      %93 = dma.done [#allocation7], 512
    $region49: #{lstm_language_model_forward.1} parent=1 // pred_fallthru
      _
    // Predicated region
    $region50: #{lstm_language_model_forward.1} parent=1 // pred_check
      _
    $region51: #{lstm_language_model_forward.1} parent=1 // pred_check_branch
      %95 = sbr.rel (0) target = $region53
    $region52: #{lstm_language_model_forward.1} parent=1 // pred_region
      %97 = dma.done [#allocation10], 16
    $region53: #{lstm_language_model_forward.1} parent=1 // pred_fallthru
      _
    %v98 = vld [vmem:[%s0] sm:$0xff]
    %v99 = vld [vmem:[%s0 + $0x8] sm:$0xff]
    %v100 = vlaneseq
    %v101 = vand.u32 %v100, 127
    %102 = vset.pattern.permute.xlu0 0
    %103 = vperm.xlu0 %102, %v98
    %v104 = vpop.permute.xlu0 %103
    %105 = vset.pattern.permute.xlu0 0
    %106 = vperm.xlu0 %105, %v99
    %v107 = vpop.permute.xlu0 %106
    %vm108 = vcmp.eq.s32.totalorder %v101, %v104
    %vm109 = vcmp.eq.s32.totalorder %v101, %v107
    %v110 = vsel %vm108, 1, 0
    %v111 = vsel %vm109, 1, 0
    %v112 = vcvt.s32.f32 %v110
    %v113 = vcvt.s32.f32 %v111
    %v114 = vld [vmem:[#allocation3] sm:$0xff]
    %v115 = vld [vmem:[#allocation3 + $0x8] sm:$0xff]
    %v116 = vld [vmem:[#allocation3 + $0x10] sm:$0xff]
    %v117 = vld [vmem:[#allocation3 + $0x18] sm:$0xff]
    %v118 = vld [vmem:[#allocation3 + $0x20] sm:$0xff]
    %v119 = vld [vmem:[#allocation3 + $0x28] sm:$0xff]
    %v120 = vld [vmem:[#allocation3 + $0x30] sm:$0xff]
    %v121 = vld [vmem:[#allocation3 + $0x38] sm:$0xff]
    %vm122 = vcmask 523264
    %v124 = vsel %vm122, %v112, 0
    %v127 = vsel %vm122, %v113, 0
    %129 = vmatpush.msra.mxu0 0.0
    %130 = vmatpush.msra.mxu0 0.0
    %131 = vmatpush.msra.mxu0 0.0
    %132 = vmatpush.msra.mxu0 0.0
    %133 = vmatpush.msra.mxu0 0.0
    %134 = vmatpush.msra.mxu0 0.0
    %135 = vmatpush.msra.mxu0 0.0
    %136 = vmatpush.msra.mxu0 0.0
    %137 = vmatpush.msra.mxu0 %v121
    %138 = vmatpush.msra.mxu0 %v120
    %139 = vmatpush.msra.mxu0 %v119
    %140 = vmatpush.msra.mxu0 %v118
    %141 = vmatpush.msra.mxu0 %v117
    %142 = vmatpush.msra.mxu0 %v116
    %143 = vmatpush.msra.mxu0 %v115
    %144 = vmatpush.msra.mxu0 %v114
    %145 = vmatmul.f32.gmra.mxu0 %v124
    %v146 = vpop.f32.mrf.mxu0
    %v147 = vadd.f32 0.0, %v146
    %148 = vmatmul.f32.gmra.mxu0 %v127
    %v149 = vpop.f32.mrf.mxu0
    %v150 = vadd.f32 0.0, %v149
    %151 = vdwg.mxu0
    %v152 = vld [vmem:[%s4] sm:$0xff]
    %v153 = vld [vmem:[%s4 + $0x8] sm:$0xff]
    %v154 = vld [vmem:[%s4 + $0x10] sm:$0xff]
    %v155 = vld [vmem:[%s4 + $0x18] sm:$0xff]
    %v156 = vld [vmem:[#allocation6] sm:$0xff]
    %v157 = vld [vmem:[#allocation6 + $0x8] sm:$0xff]
    %v158 = vld [vmem:[#allocation6 + $0x10] sm:$0xff]
    %v159 = vld [vmem:[#allocation6 + $0x18] sm:$0xff]
    %v160 = vld [vmem:[#allocation6 + $0x20] sm:$0xff]
    %v161 = vld [vmem:[#allocation6 + $0x28] sm:$0xff]
    %v162 = vld [vmem:[#allocation6 + $0x30] sm:$0xff]
    %v163 = vld [vmem:[#allocation6 + $0x38] sm:$0xff]
    %v164 = vld [vmem:[%s6] sm:$0x1]
    %v165 = vld [vmem:[%s1] sm:$0x3]
    %v166 = vld [vmem:[%s2] sm:$0x3]
    %s167 = scalar_lea.vmem %s1, 2
    %v168 = vld [vmem:[%s167] sm:$0x3]
    %s169 = scalar_lea.vmem %s2, 2
    %v170 = vld [vmem:[%s169] sm:$0x3]
    %vm171 = vcmask 261120
    %v173 = vsel %vm171, %v165, 0
    %175 = vmatpush.msra.mxu0 0.0
    %176 = vmatpush.msra.mxu0 0.0
    %177 = vmatpush.msra.mxu0 0.0
    %178 = vmatpush.msra.mxu0 0.0
    %179 = vmatpush.msra.mxu0 0.0
    %180 = vmatpush.msra.mxu0 0.0
    %181 = vmatpush.msra.mxu0 0.0
    %182 = vmatpush.msra.mxu0 0.0
    %183 = vmatpush.msra.mxu0 0.0
    %184 = vmatpush.msra.mxu0 0.0
    %185 = vmatpush.msra.mxu0 0.0
    %186 = vmatpush.msra.mxu0 0.0
    %187 = vmatpush.msra.mxu0 %v155
    %188 = vmatpush.msra.mxu0 %v154
    %189 = vmatpush.msra.mxu0 %v153
    %190 = vmatpush.msra.mxu0 %v152
    %191 = vmatmul.f32.gmra.mxu0 %v173
    %v192 = vpop.f32.mrf.mxu0
    %v193 = vadd.f32 0.0, %v192
    %194 = vdwg.mxu0
    %v195 = vadd.f32 %v147, %v193
    %v196 = vxor.u32 %v195, 2147483648
    %v197 = vmul.f32 %v196, 1.442695
    %v198 = vpow.pop %v197
    %v199 = vadd.f32 %v198, 1.0
    %v200 = vrcp.pop %v199
    %v201 = vmul.f32 %v199, %v200
    %v202 = vsub.f32 1.0, %v201
    %v203 = vmul.f32 %v200, %v202
    %v204 = vadd.f32 %v200, %v203
    %vm205 = vweird.f32 %v199
    %vm206 = vweird.f32 %v200
    %vm207 = vmor %vm205, %vm206
    %v208 = vsel %vm207, %v200, %v204
    %v209 = vand.u32 2147483647, %v199
    %vm210 = vcmp.eq.f32.partialorder %v209, 8.507059e+37
    %v211 = vand.u32 %v199, 2147483648
    %v212 = vor.u32 1.1754944e-38, %v211
    %v213 = vsel %vm210, %v212, %v208
    %v214 = vmul.f32 1.0, %v213
    %v215 = vtanh.pop %v195
    %217 = vrot.lane.b32.xlu0 %v166, 32
    %v218 = vpop.permute.xlu0 %217
    %v220 = vmul.f32 %v214, %v218
    %222 = vrot.lane.b32.xlu0 %v215, 64
    %v223 = vpop.permute.xlu0 %222
    %v225 = vmul.f32 %v214, %v223
    %227 = vrot.lane.b32.xlu0 %v225, 32
    %v228 = vpop.permute.xlu0 %227
    %v230 = vadd.f32 %v220, %v228
    %v231 = vtanh.pop %v230
    %233 = vrot.lane.b32.xlu0 %v231, 64
    %v234 = vpop.permute.xlu0 %233
    %v236 = vmul.f32 %v214, %v234
    %238 = vrot.lane.b32.xlu0 %v236, 32
    %v239 = vpop.permute.xlu0 %238
    %242 = vrot.lane.b32.xlu0 %v168, 32
    %v243 = vpop.permute.xlu0 %242
    %v245 = vsel %vm171, %v239, %v243
    %v247 = vperm.slane %v164, 0
    %v250 = vsel %vm122, %v245, 0
    %252 = vmatpush.msra.mxu0 0.0
    %253 = vmatpush.msra.mxu0 0.0
    %254 = vmatpush.msra.mxu0 0.0
    %255 = vmatpush.msra.mxu0 0.0
    %256 = vmatpush.msra.mxu0 0.0
    %257 = vmatpush.msra.mxu0 0.0
    %258 = vmatpush.msra.mxu0 0.0
    %259 = vmatpush.msra.mxu0 0.0
    %260 = vmatpush.msra.mxu0 %v163
    %261 = vmatpush.msra.mxu0 %v162
    %262 = vmatpush.msra.mxu0 %v161
    %263 = vmatpush.msra.mxu0 %v160
    %264 = vmatpush.msra.mxu0 %v159
    %265 = vmatpush.msra.mxu0 %v158
    %266 = vmatpush.msra.mxu0 %v157
    %267 = vmatpush.msra.mxu0 %v156
    %268 = vmatmul.f32.gmra.mxu0 %v250
    %v269 = vpop.f32.mrf.mxu0
    %v270 = vadd.f32 %v247, %v269
    %271 = vdwg.mxu0
    %v272 = vxor.u32 %v270, 2147483648
    %v273 = vmul.f32 %v272, 1.442695
    %v274 = vpow.pop %v273
    %v275 = vadd.f32 %v274, 1.0
    %v276 = vrcp.pop %v275
    %v277 = vmul.f32 %v275, %v276
    %v278 = vsub.f32 1.0, %v277
    %v279 = vmul.f32 %v276, %v278
    %v280 = vadd.f32 %v276, %v279
    %vm281 = vweird.f32 %v275
    %vm282 = vweird.f32 %v276
    %vm283 = vmor %vm281, %vm282
    %v284 = vsel %vm283, %v276, %v280
    %v285 = vand.u32 2147483647, %v275
    %vm286 = vcmp.eq.f32.partialorder %v285, 8.507059e+37
    %v287 = vand.u32 %v275, 2147483648
    %v288 = vor.u32 1.1754944e-38, %v287
    %v289 = vsel %vm286, %v288, %v284
    %v290 = vmul.f32 1.0, %v289
    %v291 = vtanh.pop %v270
    %293 = vrot.lane.b32.xlu0 %v170, 32
    %v294 = vpop.permute.xlu0 %293
    %v296 = vmul.f32 %v290, %v294
    %298 = vrot.lane.b32.xlu0 %v291, 64
    %v299 = vpop.permute.xlu0 %298
    %v301 = vmul.f32 %v290, %v299
    %303 = vrot.lane.b32.xlu0 %v301, 32
    %v304 = vpop.permute.xlu0 %303
    %v306 = vadd.f32 %v296, %v304
    %v307 = vtanh.pop %v306
    %309 = vrot.lane.b32.xlu0 %v307, 64
    %v310 = vpop.permute.xlu0 %309
    %v312 = vmul.f32 %v290, %v310
    %314 = vrot.lane.b32.xlu0 %v312, 32
    %v315 = vpop.permute.xlu0 %314
    %vm317 = vcmask 254976
    %318 = vst.msk [vmem:[#allocation2] sm:$0x3] %vm317, %v315
    %v319 = vsel %vm171, %v239, 0
    %321 = vmatpush.msra.mxu0 0.0
    %322 = vmatpush.msra.mxu0 0.0
    %323 = vmatpush.msra.mxu0 0.0
    %324 = vmatpush.msra.mxu0 0.0
    %325 = vmatpush.msra.mxu0 0.0
    %326 = vmatpush.msra.mxu0 0.0
    %327 = vmatpush.msra.mxu0 0.0
    %328 = vmatpush.msra.mxu0 0.0
    %329 = vmatpush.msra.mxu0 0.0
    %330 = vmatpush.msra.mxu0 0.0
    %331 = vmatpush.msra.mxu0 0.0
    %332 = vmatpush.msra.mxu0 0.0
    %333 = vmatpush.msra.mxu0 %v155
    %334 = vmatpush.msra.mxu0 %v154
    %335 = vmatpush.msra.mxu0 %v153
    %336 = vmatpush.msra.mxu0 %v152
    %337 = vmatmul.f32.gmra.mxu0 %v319
    %v338 = vpop.f32.mrf.mxu0
    %v339 = vadd.f32 0.0, %v338
    %340 = vdwg.mxu0
    %v342 = vrot.slane %v339, 6
    %v344 = vadd.f32 %v147, %v342
    %v345 = vxor.u32 %v344, 2147483648
    %v346 = vmul.f32 %v345, 1.442695
    %v347 = vpow.pop %v346
    %v348 = vadd.f32 %v347, 1.0
    %v349 = vrcp.pop %v348
    %v350 = vmul.f32 %v348, %v349
    %v351 = vsub.f32 1.0, %v350
    %v352 = vmul.f32 %v349, %v351
    %v353 = vadd.f32 %v349, %v352
    %vm354 = vweird.f32 %v348
    %vm355 = vweird.f32 %v349
    %vm356 = vmor %vm354, %vm355
    %v357 = vsel %vm356, %v349, %v353
    %v358 = vand.u32 2147483647, %v348
    %vm359 = vcmp.eq.f32.partialorder %v358, 8.507059e+37
    %v360 = vand.u32 %v348, 2147483648
    %v361 = vor.u32 1.1754944e-38, %v360
    %v362 = vsel %vm359, %v361, %v357
    %v363 = vmul.f32 1.0, %v362
    %v364 = vtanh.pop %v344
    %v366 = vrot.slane %v230, 6
    %v368 = vmul.f32 %v363, %v366
    %370 = vrot.lane.b32.xlu0 %v364, 64
    %v371 = vpop.permute.xlu0 %370
    %v373 = vmul.f32 %v363, %v371
    %375 = vrot.lane.b32.xlu0 %v373, 32
    %v376 = vpop.permute.xlu0 %375
    %v378 = vadd.f32 %v368, %v376
    %v379 = vtanh.pop %v378
    %381 = vrot.lane.b32.xlu0 %v379, 64
    %v382 = vpop.permute.xlu0 %381
    %v384 = vmul.f32 %v363, %v382
    %386 = vrot.lane.b32.xlu0 %v384, 32
    %v387 = vpop.permute.xlu0 %386
    %v389 = vrot.slane %v312, 6
    %390 = vrot.lane.b32.xlu0 %v389, 64
    %v391 = vpop.permute.xlu0 %390
    %v393 = vsel %vm171, %v387, %v391
    %v395 = vrot.slane %v393, 2
    %v396 = vsel %vm122, %v395, 0
    %398 = vmatpush.msra.mxu0 0.0
    %399 = vmatpush.msra.mxu0 0.0
    %400 = vmatpush.msra.mxu0 0.0
    %401 = vmatpush.msra.mxu0 0.0
    %402 = vmatpush.msra.mxu0 0.0
    %403 = vmatpush.msra.mxu0 0.0
    %404 = vmatpush.msra.mxu0 0.0
    %405 = vmatpush.msra.mxu0 0.0
    %406 = vmatpush.msra.mxu0 %v163
    %407 = vmatpush.msra.mxu0 %v162
    %408 = vmatpush.msra.mxu0 %v161
    %409 = vmatpush.msra.mxu0 %v160
    %410 = vmatpush.msra.mxu0 %v159
    %411 = vmatpush.msra.mxu0 %v158
    %412 = vmatpush.msra.mxu0 %v157
    %413 = vmatpush.msra.mxu0 %v156
    %414 = vmatmul.f32.gmra.mxu0 %v396
    %v415 = vpop.f32.mrf.mxu0
    %v416 = vadd.f32 %v247, %v415
    %417 = vdwg.mxu0
    %v418 = vxor.u32 %v416, 2147483648
    %v419 = vmul.f32 %v418, 1.442695
    %v420 = vpow.pop %v419
    %v421 = vadd.f32 %v420, 1.0
    %v422 = vrcp.pop %v421
    %v423 = vmul.f32 %v421, %v422
    %v424 = vsub.f32 1.0, %v423
    %v425 = vmul.f32 %v422, %v424
    %v426 = vadd.f32 %v422, %v425
    %vm427 = vweird.f32 %v421
    %vm428 = vweird.f32 %v422
    %vm429 = vmor %vm427, %vm428
    %v430 = vsel %vm429, %v422, %v426
    %v431 = vand.u32 2147483647, %v421
    %vm432 = vcmp.eq.f32.partialorder %v431, 8.507059e+37
    %v433 = vand.u32 %v421, 2147483648
    %v434 = vor.u32 1.1754944e-38, %v433
    %v435 = vsel %vm432, %v434, %v430
    %v436 = vmul.f32 1.0, %v435
    %v437 = vtanh.pop %v416
    %v438 = vmul.f32 %v436, %v306
    %440 = vrot.lane.b32.xlu0 %v437, 64
    %v441 = vpop.permute.xlu0 %440
    %v443 = vmul.f32 %v436, %v441
    %445 = vrot.lane.b32.xlu0 %v443, 32
    %v446 = vpop.permute.xlu0 %445
    %v448 = vadd.f32 %v438, %v446
    %v449 = vtanh.pop %v448
    %451 = vrot.lane.b32.xlu0 %v449, 64
    %v452 = vpop.permute.xlu0 %451
    %v454 = vmul.f32 %v436, %v452
    %456 = vrot.lane.b32.xlu0 %v454, 32
    %v457 = vpop.permute.xlu0 %456
    %459 = vst.msk [vmem:[#allocation2 + $0x2] sm:$0x3] %vm317, %v457
    %v460 = vrot.slane %v384, 2
    %461 = vrot.lane.b32.xlu0 %v460, 32
    %v462 = vpop.permute.xlu0 %461
    %v463 = vsel %vm171, %v462, 0
    %465 = vmatpush.msra.mxu0 0.0
    %466 = vmatpush.msra.mxu0 0.0
    %467 = vmatpush.msra.mxu0 0.0
    %468 = vmatpush.msra.mxu0 0.0
    %469 = vmatpush.msra.mxu0 0.0
    %470 = vmatpush.msra.mxu0 0.0
    %471 = vmatpush.msra.mxu0 0.0
    %472 = vmatpush.msra.mxu0 0.0
    %473 = vmatpush.msra.mxu0 0.0
    %474 = vmatpush.msra.mxu0 0.0
    %475 = vmatpush.msra.mxu0 0.0
    %476 = vmatpush.msra.mxu0 0.0
    %477 = vmatpush.msra.mxu0 %v155
    %478 = vmatpush.msra.mxu0 %v154
    %479 = vmatpush.msra.mxu0 %v153
    %480 = vmatpush.msra.mxu0 %v152
    %481 = vmatmul.f32.gmra.mxu0 %v463
    %v482 = vpop.f32.mrf.mxu0
    %v483 = vadd.f32 0.0, %v482
    %484 = vdwg.mxu0
    %v486 = vrot.slane %v483, 4
    %v488 = vadd.f32 %v147, %v486
    %v489 = vxor.u32 %v488, 2147483648
    %v490 = vmul.f32 %v489, 1.442695
    %v491 = vpow.pop %v490
    %v492 = vadd.f32 %v491, 1.0
    %v493 = vrcp.pop %v492
    %v494 = vmul.f32 %v492, %v493
    %v495 = vsub.f32 1.0, %v494
    %v496 = vmul.f32 %v493, %v495
    %v497 = vadd.f32 %v493, %v496
    %vm498 = vweird.f32 %v492
    %vm499 = vweird.f32 %v493
    %vm500 = vmor %vm498, %vm499
    %v501 = vsel %vm500, %v493, %v497
    %v502 = vand.u32 2147483647, %v492
    %vm503 = vcmp.eq.f32.partialorder %v502, 8.507059e+37
    %v504 = vand.u32 %v492, 2147483648
    %v505 = vor.u32 1.1754944e-38, %v504
    %v506 = vsel %vm503, %v505, %v501
    %v507 = vmul.f32 1.0, %v506
    %v508 = vtanh.pop %v488
    %v510 = vrot.slane %v378, 6
    %v512 = vmul.f32 %v507, %v510
    %514 = vrot.lane.b32.xlu0 %v508, 64
    %v515 = vpop.permute.xlu0 %514
    %v517 = vmul.f32 %v507, %v515
    %519 = vrot.lane.b32.xlu0 %v517, 32
    %v520 = vpop.permute.xlu0 %519
    %v522 = vadd.f32 %v512, %v520
    %v523 = vtanh.pop %v522
    %525 = vrot.lane.b32.xlu0 %v523, 64
    %v526 = vpop.permute.xlu0 %525
    %v528 = vmul.f32 %v507, %v526
    %530 = vrot.lane.b32.xlu0 %v528, 32
    %v531 = vpop.permute.xlu0 %530
    %v533 = vrot.slane %v454, 4
    %534 = vrot.lane.b32.xlu0 %v533, 64
    %v535 = vpop.permute.xlu0 %534
    %v537 = vsel %vm171, %v531, %v535
    %v539 = vrot.slane %v537, 4
    %v540 = vsel %vm122, %v539, 0
    %542 = vmatpush.msra.mxu0 0.0
    %543 = vmatpush.msra.mxu0 0.0
    %544 = vmatpush.msra.mxu0 0.0
    %545 = vmatpush.msra.mxu0 0.0
    %546 = vmatpush.msra.mxu0 0.0
    %547 = vmatpush.msra.mxu0 0.0
    %548 = vmatpush.msra.mxu0 0.0
    %549 = vmatpush.msra.mxu0 0.0
    %550 = vmatpush.msra.mxu0 %v163
    %551 = vmatpush.msra.mxu0 %v162
    %552 = vmatpush.msra.mxu0 %v161
    %553 = vmatpush.msra.mxu0 %v160
    %554 = vmatpush.msra.mxu0 %v159
    %555 = vmatpush.msra.mxu0 %v158
    %556 = vmatpush.msra.mxu0 %v157
    %557 = vmatpush.msra.mxu0 %v156
    %558 = vmatmul.f32.gmra.mxu0 %v540
    %v559 = vpop.f32.mrf.mxu0
    %v560 = vadd.f32 %v247, %v559
    %561 = vdwg.mxu0
    %v562 = vxor.u32 %v560, 2147483648
    %v563 = vmul.f32 %v562, 1.442695
    %v564 = vpow.pop %v563
    %v565 = vadd.f32 %v564, 1.0
    %v566 = vrcp.pop %v565
    %v567 = vmul.f32 %v565, %v566
    %v568 = vsub.f32 1.0, %v567
    %v569 = vmul.f32 %v566, %v568
    %v570 = vadd.f32 %v566, %v569
    %vm571 = vweird.f32 %v565
    %vm572 = vweird.f32 %v566
    %vm573 = vmor %vm571, %vm572
    %v574 = vsel %vm573, %v566, %v570
    %v575 = vand.u32 2147483647, %v565
    %vm576 = vcmp.eq.f32.partialorder %v575, 8.507059e+37
    %v577 = vand.u32 %v565, 2147483648
    %v578 = vor.u32 1.1754944e-38, %v577
    %v579 = vsel %vm576, %v578, %v574
    %v580 = vmul.f32 1.0, %v579
    %v581 = vtanh.pop %v560
    %v582 = vmul.f32 %v580, %v448
    %584 = vrot.lane.b32.xlu0 %v581, 64
    %v585 = vpop.permute.xlu0 %584
    %v587 = vmul.f32 %v580, %v585
    %589 = vrot.lane.b32.xlu0 %v587, 32
    %v590 = vpop.permute.xlu0 %589
    %v592 = vadd.f32 %v582, %v590
    %v593 = vtanh.pop %v592
    %595 = vrot.lane.b32.xlu0 %v593, 64
    %v596 = vpop.permute.xlu0 %595
    %v598 = vmul.f32 %v580, %v596
    %600 = vrot.lane.b32.xlu0 %v598, 32
    %v601 = vpop.permute.xlu0 %600
    %603 = vst.msk [vmem:[#allocation2 + $0x4] sm:$0x3] %vm317, %v601
    %v604 = vrot.slane %v528, 4
    %605 = vrot.lane.b32.xlu0 %v604, 32
    %v606 = vpop.permute.xlu0 %605
    %v607 = vsel %vm171, %v606, 0
    %609 = vmatpush.msra.mxu0 0.0
    %610 = vmatpush.msra.mxu0 0.0
    %611 = vmatpush.msra.mxu0 0.0
    %612 = vmatpush.msra.mxu0 0.0
    %613 = vmatpush.msra.mxu0 0.0
    %614 = vmatpush.msra.mxu0 0.0
    %615 = vmatpush.msra.mxu0 0.0
    %616 = vmatpush.msra.mxu0 0.0
    %617 = vmatpush.msra.mxu0 0.0
    %618 = vmatpush.msra.mxu0 0.0
    %619 = vmatpush.msra.mxu0 0.0
    %620 = vmatpush.msra.mxu0 0.0
    %621 = vmatpush.msra.mxu0 %v155
    %622 = vmatpush.msra.mxu0 %v154
    %623 = vmatpush.msra.mxu0 %v153
    %624 = vmatpush.msra.mxu0 %v152
    %625 = vmatmul.f32.gmra.mxu0 %v607
    %v626 = vpop.f32.mrf.mxu0
    %v627 = vadd.f32 0.0, %v626
    %628 = vdwg.mxu0
    %v630 = vrot.slane %v627, 2
    %v632 = vadd.f32 %v147, %v630
    %v633 = vxor.u32 %v632, 2147483648
    %v634 = vmul.f32 %v633, 1.442695
    %v635 = vpow.pop %v634
    %v636 = vadd.f32 %v635, 1.0
    %v637 = vrcp.pop %v636
    %v638 = vmul.f32 %v636, %v637
    %v639 = vsub.f32 1.0, %v638
    %v640 = vmul.f32 %v637, %v639
    %v641 = vadd.f32 %v637, %v640
    %vm642 = vweird.f32 %v636
    %vm643 = vweird.f32 %v637
    %vm644 = vmor %vm642, %vm643
    %v645 = vsel %vm644, %v637, %v641
    %v646 = vand.u32 2147483647, %v636
    %vm647 = vcmp.eq.f32.partialorder %v646, 8.507059e+37
    %v648 = vand.u32 %v636, 2147483648
    %v649 = vor.u32 1.1754944e-38, %v648
    %v650 = vsel %vm647, %v649, %v645
    %v651 = vmul.f32 1.0, %v650
    %v652 = vtanh.pop %v632
    %v654 = vrot.slane %v522, 6
    %v656 = vmul.f32 %v651, %v654
    %658 = vrot.lane.b32.xlu0 %v652, 64
    %v659 = vpop.permute.xlu0 %658
    %v661 = vmul.f32 %v651, %v659
    %663 = vrot.lane.b32.xlu0 %v661, 32
    %v664 = vpop.permute.xlu0 %663
    %v666 = vadd.f32 %v656, %v664
    %v667 = vtanh.pop %v666
    %669 = vrot.lane.b32.xlu0 %v667, 64
    %v670 = vpop.permute.xlu0 %669
    %v672 = vmul.f32 %v651, %v670
    %674 = vrot.lane.b32.xlu0 %v672, 32
    %v675 = vpop.permute.xlu0 %674
    %v677 = vrot.slane %v598, 2
    %678 = vrot.lane.b32.xlu0 %v677, 64
    %v679 = vpop.permute.xlu0 %678
    %v681 = vsel %vm171, %v675, %v679
    %v683 = vrot.slane %v681, 6
    %v684 = vsel %vm122, %v683, 0
    %686 = vmatpush.msra.mxu0 0.0
    %687 = vmatpush.msra.mxu0 0.0
    %688 = vmatpush.msra.mxu0 0.0
    %689 = vmatpush.msra.mxu0 0.0
    %690 = vmatpush.msra.mxu0 0.0
    %691 = vmatpush.msra.mxu0 0.0
    %692 = vmatpush.msra.mxu0 0.0
    %693 = vmatpush.msra.mxu0 0.0
    %694 = vmatpush.msra.mxu0 %v163
    %695 = vmatpush.msra.mxu0 %v162
    %696 = vmatpush.msra.mxu0 %v161
    %697 = vmatpush.msra.mxu0 %v160
    %698 = vmatpush.msra.mxu0 %v159
    %699 = vmatpush.msra.mxu0 %v158
    %700 = vmatpush.msra.mxu0 %v157
    %701 = vmatpush.msra.mxu0 %v156
    %702 = vmatmul.f32.gmra.mxu0 %v684
    %v703 = vpop.f32.mrf.mxu0
    %v704 = vadd.f32 %v247, %v703
    %705 = vdwg.mxu0
    %v706 = vxor.u32 %v704, 2147483648
    %v707 = vmul.f32 %v706, 1.442695
    %v708 = vpow.pop %v707
    %v709 = vadd.f32 %v708, 1.0
    %v710 = vrcp.pop %v709
    %v711 = vmul.f32 %v709, %v710
    %v712 = vsub.f32 1.0, %v711
    %v713 = vmul.f32 %v710, %v712
    %v714 = vadd.f32 %v710, %v713
    %vm715 = vweird.f32 %v709
    %vm716 = vweird.f32 %v710
    %vm717 = vmor %vm715, %vm716
    %v718 = vsel %vm717, %v710, %v714
    %v719 = vand.u32 2147483647, %v709
    %vm720 = vcmp.eq.f32.partialorder %v719, 8.507059e+37
    %v721 = vand.u32 %v709, 2147483648
    %v722 = vor.u32 1.1754944e-38, %v721
    %v723 = vsel %vm720, %v722, %v718
    %v724 = vmul.f32 1.0, %v723
    %v725 = vtanh.pop %v704
    %v726 = vmul.f32 %v724, %v592
    %728 = vrot.lane.b32.xlu0 %v725, 64
    %v729 = vpop.permute.xlu0 %728
    %v731 = vmul.f32 %v724, %v729
    %733 = vrot.lane.b32.xlu0 %v731, 32
    %v734 = vpop.permute.xlu0 %733
    %v736 = vadd.f32 %v726, %v734
    %v737 = vtanh.pop %v736
    %739 = vrot.lane.b32.xlu0 %v737, 64
    %v740 = vpop.permute.xlu0 %739
    %v742 = vmul.f32 %v724, %v740
    %744 = vrot.lane.b32.xlu0 %v742, 32
    %v745 = vpop.permute.xlu0 %744
    %747 = vst.msk [vmem:[#allocation2 + $0x6] sm:$0x3] %vm317, %v745
    %v748 = vrot.slane %v672, 6
    %749 = vrot.lane.b32.xlu0 %v748, 32
    %v750 = vpop.permute.xlu0 %749
    %v751 = vsel %vm171, %v750, 0
    %753 = vmatpush.msra.mxu0 0.0
    %754 = vmatpush.msra.mxu0 0.0
    %755 = vmatpush.msra.mxu0 0.0
    %756 = vmatpush.msra.mxu0 0.0
    %757 = vmatpush.msra.mxu0 0.0
    %758 = vmatpush.msra.mxu0 0.0
    %759 = vmatpush.msra.mxu0 0.0
    %760 = vmatpush.msra.mxu0 0.0
    %761 = vmatpush.msra.mxu0 0.0
    %762 = vmatpush.msra.mxu0 0.0
    %763 = vmatpush.msra.mxu0 0.0
    %764 = vmatpush.msra.mxu0 0.0
    %765 = vmatpush.msra.mxu0 %v155
    %766 = vmatpush.msra.mxu0 %v154
    %767 = vmatpush.msra.mxu0 %v153
    %768 = vmatpush.msra.mxu0 %v152
    %769 = vmatmul.f32.gmra.mxu0 %v751
    %v770 = vpop.f32.mrf.mxu0
    %v771 = vadd.f32 0.0, %v770
    %772 = vdwg.mxu0
    %v773 = vadd.f32 %v150, %v771
    %v774 = vxor.u32 %v773, 2147483648
    %v775 = vmul.f32 %v774, 1.442695
    %v776 = vpow.pop %v775
    %v777 = vadd.f32 %v776, 1.0
    %v778 = vrcp.pop %v777
    %v779 = vmul.f32 %v777, %v778
    %v780 = vsub.f32 1.0, %v779
    %v781 = vmul.f32 %v778, %v780
    %v782 = vadd.f32 %v778, %v781
    %vm783 = vweird.f32 %v777
    %vm784 = vweird.f32 %v778
    %vm785 = vmor %vm783, %vm784
    %v786 = vsel %vm785, %v778, %v782
    %v787 = vand.u32 2147483647, %v777
    %vm788 = vcmp.eq.f32.partialorder %v787, 8.507059e+37
    %v789 = vand.u32 %v777, 2147483648
    %v790 = vor.u32 1.1754944e-38, %v789
    %v791 = vsel %vm788, %v790, %v786
    %v792 = vmul.f32 1.0, %v791
    %v793 = vtanh.pop %v773
    %v795 = vrot.slane %v666, 6
    %v797 = vmul.f32 %v792, %v795
    %799 = vrot.lane.b32.xlu0 %v793, 64
    %v800 = vpop.permute.xlu0 %799
    %v802 = vmul.f32 %v792, %v800
    %804 = vrot.lane.b32.xlu0 %v802, 32
    %v805 = vpop.permute.xlu0 %804
    %v807 = vadd.f32 %v797, %v805
    %v808 = vtanh.pop %v807
    %810 = vrot.lane.b32.xlu0 %v808, 64
    %v811 = vpop.permute.xlu0 %810
    %v813 = vmul.f32 %v792, %v811
    %815 = vrot.lane.b32.xlu0 %v813, 32
    %v816 = vpop.permute.xlu0 %815
    %818 = vrot.lane.b32.xlu0 %v742, 64
    %v819 = vpop.permute.xlu0 %818
    %v821 = vsel %vm171, %v816, %v819
    %v823 = vsel %vm122, %v821, 0
    %825 = vmatpush.msra.mxu0 0.0
    %826 = vmatpush.msra.mxu0 0.0
    %827 = vmatpush.msra.mxu0 0.0
    %828 = vmatpush.msra.mxu0 0.0
    %829 = vmatpush.msra.mxu0 0.0
    %830 = vmatpush.msra.mxu0 0.0
    %831 = vmatpush.msra.mxu0 0.0
    %832 = vmatpush.msra.mxu0 0.0
    %833 = vmatpush.msra.mxu0 %v163
    %834 = vmatpush.msra.mxu0 %v162
    %835 = vmatpush.msra.mxu0 %v161
    %836 = vmatpush.msra.mxu0 %v160
    %837 = vmatpush.msra.mxu0 %v159
    %838 = vmatpush.msra.mxu0 %v158
    %839 = vmatpush.msra.mxu0 %v157
    %840 = vmatpush.msra.mxu0 %v156
    %841 = vmatmul.f32.gmra.mxu0 %v823
    %v842 = vpop.f32.mrf.mxu0
    %v843 = vadd.f32 %v247, %v842
    %844 = vdwg.mxu0
    %v845 = vxor.u32 %v843, 2147483648
    %v846 = vmul.f32 %v845, 1.442695
    %v847 = vpow.pop %v846
    %v848 = vadd.f32 %v847, 1.0
    %v849 = vrcp.pop %v848
    %v850 = vmul.f32 %v848, %v849
    %v851 = vsub.f32 1.0, %v850
    %v852 = vmul.f32 %v849, %v851
    %v853 = vadd.f32 %v849, %v852
    %vm854 = vweird.f32 %v848
    %vm855 = vweird.f32 %v849
    %vm856 = vmor %vm854, %vm855
    %v857 = vsel %vm856, %v849, %v853
    %v858 = vand.u32 2147483647, %v848
    %vm859 = vcmp.eq.f32.partialorder %v858, 8.507059e+37
    %v860 = vand.u32 %v848, 2147483648
    %v861 = vor.u32 1.1754944e-38, %v860
    %v862 = vsel %vm859, %v861, %v857
    %v863 = vmul.f32 1.0, %v862
    %v864 = vtanh.pop %v843
    %v865 = vmul.f32 %v863, %v736
    %867 = vrot.lane.b32.xlu0 %v864, 64
    %v868 = vpop.permute.xlu0 %867
    %v870 = vmul.f32 %v863, %v868
    %872 = vrot.lane.b32.xlu0 %v870, 32
    %v873 = vpop.permute.xlu0 %872
    %v875 = vadd.f32 %v865, %v873
    %v876 = vtanh.pop %v875
    %878 = vrot.lane.b32.xlu0 %v876, 64
    %v879 = vpop.permute.xlu0 %878
    %v881 = vmul.f32 %v863, %v879
    %883 = vrot.lane.b32.xlu0 %v881, 32
    %v884 = vpop.permute.xlu0 %883
    %886 = vst.msk [vmem:[#allocation2 + $0x8] sm:$0x3] %vm317, %v884
    %v887 = vsel %vm171, %v816, 0
    %889 = vmatpush.msra.mxu0 0.0
    %890 = vmatpush.msra.mxu0 0.0
    %891 = vmatpush.msra.mxu0 0.0
    %892 = vmatpush.msra.mxu0 0.0
    %893 = vmatpush.msra.mxu0 0.0
    %894 = vmatpush.msra.mxu0 0.0
    %895 = vmatpush.msra.mxu0 0.0
    %896 = vmatpush.msra.mxu0 0.0
    %897 = vmatpush.msra.mxu0 0.0
    %898 = vmatpush.msra.mxu0 0.0
    %899 = vmatpush.msra.mxu0 0.0
    %900 = vmatpush.msra.mxu0 0.0
    %901 = vmatpush.msra.mxu0 %v155
    %902 = vmatpush.msra.mxu0 %v154
    %903 = vmatpush.msra.mxu0 %v153
    %904 = vmatpush.msra.mxu0 %v152
    %905 = vmatmul.f32.gmra.mxu0 %v887
    %v906 = vpop.f32.mrf.mxu0
    %v907 = vadd.f32 0.0, %v906
    %908 = vdwg.mxu0
    %v910 = vrot.slane %v907, 6
    %v912 = vadd.f32 %v150, %v910
    %v913 = vxor.u32 %v912, 2147483648
    %v914 = vmul.f32 %v913, 1.442695
    %v915 = vpow.pop %v914
    %v916 = vadd.f32 %v915, 1.0
    %v917 = vrcp.pop %v916
    %v918 = vmul.f32 %v916, %v917
    %v919 = vsub.f32 1.0, %v918
    %v920 = vmul.f32 %v917, %v919
    %v921 = vadd.f32 %v917, %v920
    %vm922 = vweird.f32 %v916
    %vm923 = vweird.f32 %v917
    %vm924 = vmor %vm922, %vm923
    %v925 = vsel %vm924, %v917, %v921
    %v926 = vand.u32 2147483647, %v916
    %vm927 = vcmp.eq.f32.partialorder %v926, 8.507059e+37
    %v928 = vand.u32 %v916, 2147483648
    %v929 = vor.u32 1.1754944e-38, %v928
    %v930 = vsel %vm927, %v929, %v925
    %v931 = vmul.f32 1.0, %v930
    %v932 = vtanh.pop %v912
    %v934 = vrot.slane %v807, 6
    %v936 = vmul.f32 %v931, %v934
    %938 = vrot.lane.b32.xlu0 %v932, 64
    %v939 = vpop.permute.xlu0 %938
    %v941 = vmul.f32 %v931, %v939
    %943 = vrot.lane.b32.xlu0 %v941, 32
    %v944 = vpop.permute.xlu0 %943
    %v946 = vadd.f32 %v936, %v944
    %v947 = vtanh.pop %v946
    %949 = vrot.lane.b32.xlu0 %v947, 64
    %v950 = vpop.permute.xlu0 %949
    %v952 = vmul.f32 %v931, %v950
    %954 = vrot.lane.b32.xlu0 %v952, 32
    %v955 = vpop.permute.xlu0 %954
    %v957 = vrot.slane %v881, 6
    %958 = vrot.lane.b32.xlu0 %v957, 64
    %v959 = vpop.permute.xlu0 %958
    %v961 = vsel %vm171, %v955, %v959
    %v963 = vrot.slane %v961, 2
    %v964 = vsel %vm122, %v963, 0
    %966 = vmatpush.msra.mxu0 0.0
    %967 = vmatpush.msra.mxu0 0.0
    %968 = vmatpush.msra.mxu0 0.0
    %969 = vmatpush.msra.mxu0 0.0
    %970 = vmatpush.msra.mxu0 0.0
    %971 = vmatpush.msra.mxu0 0.0
    %972 = vmatpush.msra.mxu0 0.0
    %973 = vmatpush.msra.mxu0 0.0
    %974 = vmatpush.msra.mxu0 %v163
    %975 = vmatpush.msra.mxu0 %v162
    %976 = vmatpush.msra.mxu0 %v161
    %977 = vmatpush.msra.mxu0 %v160
    %978 = vmatpush.msra.mxu0 %v159
    %979 = vmatpush.msra.mxu0 %v158
    %980 = vmatpush.msra.mxu0 %v157
    %981 = vmatpush.msra.mxu0 %v156
    %982 = vmatmul.f32.gmra.mxu0 %v964
    %v983 = vpop.f32.mrf.mxu0
    %v984 = vadd.f32 %v247, %v983
    %985 = vdwg.mxu0
    %v986 = vxor.u32 %v984, 2147483648
    %v987 = vmul.f32 %v986, 1.442695
    %v988 = vpow.pop %v987
    %v989 = vadd.f32 %v988, 1.0
    %v990 = vrcp.pop %v989
    %v991 = vmul.f32 %v989, %v990
    %v992 = vsub.f32 1.0, %v991
    %v993 = vmul.f32 %v990, %v992
    %v994 = vadd.f32 %v990, %v993
    %vm995 = vweird.f32 %v989
    %vm996 = vweird.f32 %v990
    %vm997 = vmor %vm995, %vm996
    %v998 = vsel %vm997, %v990, %v994
    %v999 = vand.u32 2147483647, %v989
    %vm1000 = vcmp.eq.f32.partialorder %v999, 8.507059e+37
    %v1001 = vand.u32 %v989, 2147483648
    %v1002 = vor.u32 1.1754944e-38, %v1001
    %v1003 = vsel %vm1000, %v1002, %v998
    %v1004 = vmul.f32 1.0, %v1003
    %v1005 = vtanh.pop %v984
    %v1006 = vmul.f32 %v1004, %v875
    %1008 = vrot.lane.b32.xlu0 %v1005, 64
    %v1009 = vpop.permute.xlu0 %1008
    %v1011 = vmul.f32 %v1004, %v1009
    %1013 = vrot.lane.b32.xlu0 %v1011, 32
    %v1014 = vpop.permute.xlu0 %1013
    %v1016 = vadd.f32 %v1006, %v1014
    %v1017 = vtanh.pop %v1016
    %1019 = vrot.lane.b32.xlu0 %v1017, 64
    %v1020 = vpop.permute.xlu0 %1019
    %v1022 = vmul.f32 %v1004, %v1020
    %1024 = vrot.lane.b32.xlu0 %v1022, 32
    %v1025 = vpop.permute.xlu0 %1024
    %1027 = vst.msk [vmem:[#allocation2 + $0xa] sm:$0x3] %vm317, %v1025
    %v1028 = vrot.slane %v952, 2
    %1029 = vrot.lane.b32.xlu0 %v1028, 32
    %v1030 = vpop.permute.xlu0 %1029
    %v1031 = vsel %vm171, %v1030, 0
    %1033 = vmatpush.msra.mxu0 0.0
    %1034 = vmatpush.msra.mxu0 0.0
    %1035 = vmatpush.msra.mxu0 0.0
    %1036 = vmatpush.msra.mxu0 0.0
    %1037 = vmatpush.msra.mxu0 0.0
    %1038 = vmatpush.msra.mxu0 0.0
    %1039 = vmatpush.msra.mxu0 0.0
    %1040 = vmatpush.msra.mxu0 0.0
    %1041 = vmatpush.msra.mxu0 0.0
    %1042 = vmatpush.msra.mxu0 0.0
    %1043 = vmatpush.msra.mxu0 0.0
    %1044 = vmatpush.msra.mxu0 0.0
    %1045 = vmatpush.msra.mxu0 %v155
    %1046 = vmatpush.msra.mxu0 %v154
    %1047 = vmatpush.msra.mxu0 %v153
    %1048 = vmatpush.msra.mxu0 %v152
    %1049 = vmatmul.f32.gmra.mxu0 %v1031
    %v1050 = vpop.f32.mrf.mxu0
    %v1051 = vadd.f32 0.0, %v1050
    %1052 = vdwg.mxu0
    %v1054 = vrot.slane %v1051, 4
    %v1056 = vadd.f32 %v150, %v1054
    %v1057 = vxor.u32 %v1056, 2147483648
    %v1058 = vmul.f32 %v1057, 1.442695
    %v1059 = vpow.pop %v1058
    %v1060 = vadd.f32 %v1059, 1.0
    %v1061 = vrcp.pop %v1060
    %v1062 = vmul.f32 %v1060, %v1061
    %v1063 = vsub.f32 1.0, %v1062
    %v1064 = vmul.f32 %v1061, %v1063
    %v1065 = vadd.f32 %v1061, %v1064
    %vm1066 = vweird.f32 %v1060
    %vm1067 = vweird.f32 %v1061
    %vm1068 = vmor %vm1066, %vm1067
    %v1069 = vsel %vm1068, %v1061, %v1065
    %v1070 = vand.u32 2147483647, %v1060
    %vm1071 = vcmp.eq.f32.partialorder %v1070, 8.507059e+37
    %v1072 = vand.u32 %v1060, 2147483648
    %v1073 = vor.u32 1.1754944e-38, %v1072
    %v1074 = vsel %vm1071, %v1073, %v1069
    %v1075 = vmul.f32 1.0, %v1074
    %v1076 = vtanh.pop %v1056
    %v1078 = vrot.slane %v946, 6
    %v1080 = vmul.f32 %v1075, %v1078
    %1082 = vrot.lane.b32.xlu0 %v1076, 64
    %v1083 = vpop.permute.xlu0 %1082
    %v1085 = vmul.f32 %v1075, %v1083
    %1087 = vrot.lane.b32.xlu0 %v1085, 32
    %v1088 = vpop.permute.xlu0 %1087
    %v1090 = vadd.f32 %v1080, %v1088
    %v1091 = vtanh.pop %v1090
    %1093 = vrot.lane.b32.xlu0 %v1091, 64
    %v1094 = vpop.permute.xlu0 %1093
    %v1096 = vmul.f32 %v1075, %v1094
    %1098 = vrot.lane.b32.xlu0 %v1096, 32
    %v1099 = vpop.permute.xlu0 %1098
    %v1101 = vrot.slane %v1022, 4
    %1102 = vrot.lane.b32.xlu0 %v1101, 64
    %v1103 = vpop.permute.xlu0 %1102
    %v1105 = vsel %vm171, %v1099, %v1103
    %v1107 = vrot.slane %v1105, 4
    %v1108 = vsel %vm122, %v1107, 0
    %1110 = vmatpush.msra.mxu0 0.0
    %1111 = vmatpush.msra.mxu0 0.0
    %1112 = vmatpush.msra.mxu0 0.0
    %1113 = vmatpush.msra.mxu0 0.0
    %1114 = vmatpush.msra.mxu0 0.0
    %1115 = vmatpush.msra.mxu0 0.0
    %1116 = vmatpush.msra.mxu0 0.0
    %1117 = vmatpush.msra.mxu0 0.0
    %1118 = vmatpush.msra.mxu0 %v163
    %1119 = vmatpush.msra.mxu0 %v162
    %1120 = vmatpush.msra.mxu0 %v161
    %1121 = vmatpush.msra.mxu0 %v160
    %1122 = vmatpush.msra.mxu0 %v159
    %1123 = vmatpush.msra.mxu0 %v158
    %1124 = vmatpush.msra.mxu0 %v157
    %1125 = vmatpush.msra.mxu0 %v156
    %1126 = vmatmul.f32.gmra.mxu0 %v1108
    %v1127 = vpop.f32.mrf.mxu0
    %v1128 = vadd.f32 %v247, %v1127
    %1129 = vdwg.mxu0
    %v1130 = vxor.u32 %v1128, 2147483648
    %v1131 = vmul.f32 %v1130, 1.442695
    %v1132 = vpow.pop %v1131
    %v1133 = vadd.f32 %v1132, 1.0
    %v1134 = vrcp.pop %v1133
    %v1135 = vmul.f32 %v1133, %v1134
    %v1136 = vsub.f32 1.0, %v1135
    %v1137 = vmul.f32 %v1134, %v1136
    %v1138 = vadd.f32 %v1134, %v1137
    %vm1139 = vweird.f32 %v1133
    %vm1140 = vweird.f32 %v1134
    %vm1141 = vmor %vm1139, %vm1140
    %v1142 = vsel %vm1141, %v1134, %v1138
    %v1143 = vand.u32 2147483647, %v1133
    %vm1144 = vcmp.eq.f32.partialorder %v1143, 8.507059e+37
    %v1145 = vand.u32 %v1133, 2147483648
    %v1146 = vor.u32 1.1754944e-38, %v1145
    %v1147 = vsel %vm1144, %v1146, %v1142
    %v1148 = vmul.f32 1.0, %v1147
    %v1149 = vtanh.pop %v1128
    %v1150 = vmul.f32 %v1148, %v1016
    %1152 = vrot.lane.b32.xlu0 %v1149, 64
    %v1153 = vpop.permute.xlu0 %1152
    %v1155 = vmul.f32 %v1148, %v1153
    %1157 = vrot.lane.b32.xlu0 %v1155, 32
    %v1158 = vpop.permute.xlu0 %1157
    %v1160 = vadd.f32 %v1150, %v1158
    %v1161 = vtanh.pop %v1160
    %1163 = vrot.lane.b32.xlu0 %v1161, 64
    %v1164 = vpop.permute.xlu0 %1163
    %v1166 = vmul.f32 %v1148, %v1164
    %1168 = vrot.lane.b32.xlu0 %v1166, 32
    %v1169 = vpop.permute.xlu0 %1168
    %1171 = vst.msk [vmem:[#allocation2 + $0xc] sm:$0x3] %vm317, %v1169
    %v1172 = vrot.slane %v1096, 4
    %1173 = vrot.lane.b32.xlu0 %v1172, 32
    %v1174 = vpop.permute.xlu0 %1173
    %v1175 = vsel %vm171, %v1174, 0
    %1177 = vmatpush.msra.mxu0 0.0
    %1178 = vmatpush.msra.mxu0 0.0
    %1179 = vmatpush.msra.mxu0 0.0
    %1180 = vmatpush.msra.mxu0 0.0
    %1181 = vmatpush.msra.mxu0 0.0
    %1182 = vmatpush.msra.mxu0 0.0
    %1183 = vmatpush.msra.mxu0 0.0
    %1184 = vmatpush.msra.mxu0 0.0
    %1185 = vmatpush.msra.mxu0 0.0
    %1186 = vmatpush.msra.mxu0 0.0
    %1187 = vmatpush.msra.mxu0 0.0
    %1188 = vmatpush.msra.mxu0 0.0
    %1189 = vmatpush.msra.mxu0 %v155
    %1190 = vmatpush.msra.mxu0 %v154
    %1191 = vmatpush.msra.mxu0 %v153
    %1192 = vmatpush.msra.mxu0 %v152
    %1193 = vmatmul.f32.gmra.mxu0 %v1175
    %v1194 = vpop.f32.mrf.mxu0
    %v1195 = vadd.f32 0.0, %v1194
    %1196 = vdwg.mxu0
    %v1198 = vrot.slane %v1195, 2
    %v1200 = vadd.f32 %v150, %v1198
    %v1201 = vxor.u32 %v1200, 2147483648
    %v1202 = vmul.f32 %v1201, 1.442695
    %v1203 = vpow.pop %v1202
    %v1204 = vadd.f32 %v1203, 1.0
    %v1205 = vrcp.pop %v1204
    %v1206 = vmul.f32 %v1204, %v1205
    %v1207 = vsub.f32 1.0, %v1206
    %v1208 = vmul.f32 %v1205, %v1207
    %v1209 = vadd.f32 %v1205, %v1208
    %vm1210 = vweird.f32 %v1204
    %vm1211 = vweird.f32 %v1205
    %vm1212 = vmor %vm1210, %vm1211
    %v1213 = vsel %vm1212, %v1205, %v1209
    %v1214 = vand.u32 2147483647, %v1204
    %vm1215 = vcmp.eq.f32.partialorder %v1214, 8.507059e+37
    %v1216 = vand.u32 %v1204, 2147483648
    %v1217 = vor.u32 1.1754944e-38, %v1216
    %v1218 = vsel %vm1215, %v1217, %v1213
    %v1219 = vmul.f32 1.0, %v1218
    %v1220 = vtanh.pop %v1200
    %v1222 = vrot.slane %v1090, 6
    %v1224 = vmul.f32 %v1219, %v1222
    %1226 = vrot.lane.b32.xlu0 %v1220, 64
    %v1227 = vpop.permute.xlu0 %1226
    %v1229 = vmul.f32 %v1219, %v1227
    %1231 = vrot.lane.b32.xlu0 %v1229, 32
    %v1232 = vpop.permute.xlu0 %1231
    %v1234 = vadd.f32 %v1224, %v1232
    %v1235 = vtanh.pop %v1234
    %1237 = vrot.lane.b32.xlu0 %v1235, 64
    %v1238 = vpop.permute.xlu0 %1237
    %v1240 = vmul.f32 %v1219, %v1238
    %1242 = vrot.lane.b32.xlu0 %v1240, 32
    %v1243 = vpop.permute.xlu0 %1242
    %v1245 = vrot.slane %v1166, 2
    %1246 = vrot.lane.b32.xlu0 %v1245, 64
    %v1247 = vpop.permute.xlu0 %1246
    %v1249 = vsel %vm171, %v1243, %v1247
    %v1251 = vrot.slane %v1249, 6
    %v1252 = vsel %vm122, %v1251, 0
    %1254 = vmatpush.msra.mxu0 0.0
    %1255 = vmatpush.msra.mxu0 0.0
    %1256 = vmatpush.msra.mxu0 0.0
    %1257 = vmatpush.msra.mxu0 0.0
    %1258 = vmatpush.msra.mxu0 0.0
    %1259 = vmatpush.msra.mxu0 0.0
    %1260 = vmatpush.msra.mxu0 0.0
    %1261 = vmatpush.msra.mxu0 0.0
    %1262 = vmatpush.msra.mxu0 %v163
    %1263 = vmatpush.msra.mxu0 %v162
    %1264 = vmatpush.msra.mxu0 %v161
    %1265 = vmatpush.msra.mxu0 %v160
    %1266 = vmatpush.msra.mxu0 %v159
    %1267 = vmatpush.msra.mxu0 %v158
    %1268 = vmatpush.msra.mxu0 %v157
    %1269 = vmatpush.msra.mxu0 %v156
    %1270 = vmatmul.f32.gmra.mxu0 %v1252
    %v1271 = vpop.f32.mrf.mxu0
    %v1272 = vadd.f32 %v247, %v1271
    %1273 = vdwg.mxu0
    %v1274 = vxor.u32 %v1272, 2147483648
    %v1275 = vmul.f32 %v1274, 1.442695
    %v1276 = vpow.pop %v1275
    %v1277 = vadd.f32 %v1276, 1.0
    %v1278 = vrcp.pop %v1277
    %v1279 = vmul.f32 %v1277, %v1278
    %v1280 = vsub.f32 1.0, %v1279
    %v1281 = vmul.f32 %v1278, %v1280
    %v1282 = vadd.f32 %v1278, %v1281
    %vm1283 = vweird.f32 %v1277
    %vm1284 = vweird.f32 %v1278
    %vm1285 = vmor %vm1283, %vm1284
    %v1286 = vsel %vm1285, %v1278, %v1282
    %v1287 = vand.u32 2147483647, %v1277
    %vm1288 = vcmp.eq.f32.partialorder %v1287, 8.507059e+37
    %v1289 = vand.u32 %v1277, 2147483648
    %v1290 = vor.u32 1.1754944e-38, %v1289
    %v1291 = vsel %vm1288, %v1290, %v1286
    %v1292 = vmul.f32 1.0, %v1291
    %v1293 = vtanh.pop %v1272
    %v1294 = vmul.f32 %v1292, %v1160
    %1296 = vrot.lane.b32.xlu0 %v1293, 64
    %v1297 = vpop.permute.xlu0 %1296
    %v1299 = vmul.f32 %v1292, %v1297
    %1301 = vrot.lane.b32.xlu0 %v1299, 32
    %v1302 = vpop.permute.xlu0 %1301
    %v1304 = vadd.f32 %v1294, %v1302
    %v1305 = vtanh.pop %v1304
    %1307 = vrot.lane.b32.xlu0 %v1305, 64
    %v1308 = vpop.permute.xlu0 %1307
    %v1310 = vmul.f32 %v1292, %v1308
    %1312 = vrot.lane.b32.xlu0 %v1310, 32
    %v1313 = vpop.permute.xlu0 %1312
    %1315 = vst.msk [vmem:[#allocation2 + $0xe] sm:$0x3] %vm317, %v1313
    %v1316 = vld [vmem:[#allocation2] sm:$0xff]
    %v1317 = vld [vmem:[#allocation2 + $0x8] sm:$0xff]
    %v1318 = vld [vmem:[#allocation8] sm:$0xff]
    %v1319 = vld [vmem:[#allocation8 + $0x8] sm:$0xff]
    %v1320 = vld [vmem:[#allocation8 + $0x10] sm:$0xff]
    %v1321 = vld [vmem:[#allocation8 + $0x18] sm:$0xff]
    %v1322 = vld [vmem:[#allocation9] sm:$0x1]
    %v1324 = vperm.slane %v1322, 0
    %v1327 = vsel %vm171, %v1316, 0
    %v1330 = vsel %vm171, %v1317, 0
    %1332 = vmatpush.msra.mxu0 0.0
    %1333 = vmatpush.msra.mxu0 0.0
    %1334 = vmatpush.msra.mxu0 0.0
    %1335 = vmatpush.msra.mxu0 0.0
    %1336 = vmatpush.msra.mxu0 0.0
    %1337 = vmatpush.msra.mxu0 0.0
    %1338 = vmatpush.msra.mxu0 0.0
    %1339 = vmatpush.msra.mxu0 0.0
    %1340 = vmatpush.msra.mxu0 0.0
    %1341 = vmatpush.msra.mxu0 0.0
    %1342 = vmatpush.msra.mxu0 0.0
    %1343 = vmatpush.msra.mxu0 0.0
    %1344 = vmatpush.msra.mxu0 %v1321
    %1345 = vmatpush.msra.mxu0 %v1320
    %1346 = vmatpush.msra.mxu0 %v1319
    %1347 = vmatpush.msra.mxu0 %v1318
    %1348 = vmatmul.f32.gmra.mxu0 %v1327
    %v1349 = vpop.f32.mrf.mxu0
    %v1350 = vadd.f32 %v1324, %v1349
    %1351 = vmatmul.f32.gmra.mxu0 %v1330
    %v1352 = vpop.f32.mrf.mxu0
    %v1353 = vadd.f32 %v1324, %v1352
    %1354 = vdwg.mxu0
    %1355 = vst [vmem:[%s9] sm:$0xff] %v1350
    %1356 = vst [vmem:[%s9 + $0x8] sm:$0xff] %v1353
    %vm1357 = vcmask 261126
    %1358 = vst.msk [vmem:[#allocation11 - $0x6] sm:$0xc0] %vm1357, %v1243
    %s1359 = scalar_lea.vmem [#allocation11], 2
    %1360 = vst.msk [vmem:[%s1359] sm:$0x3] %vm317, %v1313
    %1362 = vrot.lane.b32.xlu0 %v1234, 96
    %v1363 = vpop.permute.xlu0 %1362
    %1365 = vst.msk [vmem:[#allocation12 - $0x6] sm:$0xc0] %vm1357, %v1363
    %1367 = vrot.lane.b32.xlu0 %v1304, 96
    %v1368 = vpop.permute.xlu0 %1367
    %s1370 = scalar_lea.vmem [#allocation12], 2
    %1371 = vst.msk [vmem:[%s1370] sm:$0x3] %vm317, %v1368
    // Predicated region
    $region54: #{lstm_language_model_forward.1} parent=1 // pred_check
      _
    $region55: #{lstm_language_model_forward.1} parent=1 // pred_check_branch
      %1373 = sbr.rel (0) target = $region57
    $region56: #{lstm_language_model_forward.1} parent=1 // pred_region
      _
    $region57: #{lstm_language_model_forward.1} parent=1 // pred_fallthru
      _
    // Predicated region
    $region58: #{lstm_language_model_forward.1} parent=1 // pred_check
      _
    $region59: #{lstm_language_model_forward.1} parent=1 // pred_check_branch
      %1375 = sbr.rel (0) target = $region61
    $region60: #{lstm_language_model_forward.1} parent=1 // pred_region
      %1377 = vsyncadd [#allocation5], 0
      %s1378 = sshll.u32 [#allocation11], 4
      %s1379 = int_to_ptr.vmem [resolvable:$true] %s1378
      %s1380 = sshll.u32 %s10, 4
      %s1381 = int_to_ptr.hbm [resolvable:$true] %s1380
      %1386 = dma.vmem_to_hbm [thread:$0]  %s1379, 64, %s1381, [#allocation5], 32, 32, 2
    $region61: #{lstm_language_model_forward.1} parent=1 // pred_fallthru
      _
    // Predicated region
    $region62: #{lstm_language_model_forward.1} parent=1 // pred_check
      _
    $region63: #{lstm_language_model_forward.1} parent=1 // pred_check_branch
      %1388 = sbr.rel (0) target = $region65
    $region64: #{lstm_language_model_forward.1} parent=1 // pred_region
      %1390 = vsyncadd [#allocation13], 0
      %s1391 = sshll.u32 [#allocation12], 4
      %s1392 = int_to_ptr.vmem [resolvable:$true] %s1391
      %s1393 = sshll.u32 %s11, 4
      %s1394 = int_to_ptr.hbm [resolvable:$true] %s1393
      %1399 = dma.vmem_to_hbm [thread:$0]  %s1392, 64, %s1394, [#allocation13], 32, 32, 2
    $region65: #{lstm_language_model_forward.1} parent=1 // pred_fallthru
      _
    // Predicated region
    $region66: #{lstm_language_model_forward.1} parent=1 // pred_check
      _
    $region67: #{lstm_language_model_forward.1} parent=1 // pred_check_branch
      %1401 = sbr.rel (0) target = $region69
    $region68: #{lstm_language_model_forward.1} parent=1 // pred_region
      _
    $region69: #{lstm_language_model_forward.1} parent=1 // pred_fallthru
      _
    // Predicated region
    $region70: #{lstm_language_model_forward.1} parent=1 // pred_check
      _
    $region71: #{lstm_language_model_forward.1} parent=1 // pred_check_branch
      %1403 = sbr.rel (0) target = $region73
    $region72: #{lstm_language_model_forward.1} parent=1 // pred_region
      %1405 = dma.done [#allocation5], 64
    $region73: #{lstm_language_model_forward.1} parent=1 // pred_fallthru
      _
    // Predicated region
    $region74: #{lstm_language_model_forward.1} parent=1 // pred_check
      _
    $region75: #{lstm_language_model_forward.1} parent=1 // pred_check_branch
      %1407 = sbr.rel (0) target = $region77
    $region76: #{lstm_language_model_forward.1} parent=1 // pred_region
      %1409 = dma.done [#allocation13], 64
    $region77: #{lstm_language_model_forward.1} parent=1 // pred_fallthru
      _
    %1410 = vsyncpa [#allocation4], 1
    %1411 = vsyncpa [#allocation7], 1
    %1412 = vsyncpa [#allocation10], 1
    %1413 = vsyncpa [#allocation5], 1
    %1414 = vsyncpa [#allocation13], 1

</llo_original>
